<compile_context>
chip_gen: v6e
topology: v6e:2x2x1
jax: 0.10.0
libtpu: 0.0.40
codegen_flags: <defaults>
</compile_context>

<pallas_src>
import functools

import jax
import jax.numpy as jnp
from jax.experimental import pallas as pl
from jax.experimental.pallas import tpu as pltpu


FPAD = 128  # lane-aligned feature padding (all logical feature dims <= 128)


# --------------------------------------------------------------------------
# Fused VAE forward kernel (one grid step = one batch tile)
# --------------------------------------------------------------------------
def _vae_fused_kernel(*refs, n_enc, n_dec):
    """refs = [x, eps,
               enc_w0, enc_b0, ..., heads_w, heads_b,
               dec_w0, dec_b0, ..., out_w, out_b,        (inputs)
               recon, mu, log_var]                        (outputs)
    All feature dims padded to FPAD; heads_w is [FPAD, 2*FPAD] (mu ++ log_var).
    """
    n_in = 2 + 2 * n_enc + 2 + 2 * n_dec + 2
    in_refs = refs[:n_in]
    recon_ref, mu_ref, lv_ref = refs[n_in:n_in + 3]

    x_ref, eps_ref = in_refs[0], in_refs[1]
    pidx = 2

    # ---- Encoder shared MLP: Linear + ReLU per layer ----
    h = x_ref[...].astype(jnp.float32)
    for _ in range(n_enc):
        w = in_refs[pidx][...]
        b = in_refs[pidx + 1][...]
        pidx += 2
        h = jnp.maximum(jnp.dot(h, w, preferred_element_type=jnp.float32) + b, 0.0)

    # ---- Fused mu / log_var head: one matmul, lane-aligned split ----
    w = in_refs[pidx][...]
    b = in_refs[pidx + 1][...]
    pidx += 2
    heads = jnp.dot(h, w, preferred_element_type=jnp.float32) + b   # [Bt, 2*FPAD]
    mu = heads[:, :FPAD]
    lv = heads[:, FPAD:]

    # ---- Reparameterization: z = exp(0.5*log_var) * eps + mu ----
    eps = eps_ref[...].astype(jnp.float32)
    z = jnp.exp(0.5 * lv) * eps + mu

    # ---- Decoder MLP: Linear + ReLU per hidden layer ----
    d = z
    for _ in range(n_dec):
        w = in_refs[pidx][...]
        b = in_refs[pidx + 1][...]
        pidx += 2
        d = jnp.maximum(jnp.dot(d, w, preferred_element_type=jnp.float32) + b, 0.0)

    # ---- Output layer: Linear + Sigmoid ----
    w = in_refs[pidx][...]
    b = in_refs[pidx + 1][...]
    recon = jax.nn.sigmoid(jnp.dot(d, w, preferred_element_type=jnp.float32) + b)

    recon_ref[...] = recon.astype(recon_ref.dtype)
    mu_ref[...] = mu.astype(mu_ref.dtype)
    lv_ref[...] = lv.astype(lv_ref.dtype)


# --------------------------------------------------------------------------
# Parameter init (mimics nn.Linear default: U(-1/sqrt(fan_in), 1/sqrt(fan_in)))
# --------------------------------------------------------------------------
def _init_linear(key, d_in, d_out, dtype=jnp.float32):
    kw, kb = jax.random.split(key)
    bound = 1.0 / jnp.sqrt(float(d_in))
    w = jax.random.uniform(kw, (d_in, d_out), dtype, minval=-bound, maxval=bound)
    b = jax.random.uniform(kb, (1, d_out), dtype, minval=-bound, maxval=bound)
    return w, b


def init_vae_params(key, x_dim, z_dim, encoder_hidden_dims, decoder_hidden_dims):
    params = {"enc_shared": [], "dec": []}
    keys = iter(jax.random.split(key, 64))

    enc_dims = [x_dim] + list(encoder_hidden_dims)
    for i in range(len(enc_dims) - 1):
        params["enc_shared"].append(_init_linear(next(keys), enc_dims[i], enc_dims[i + 1]))
    params["enc_mu"] = _init_linear(next(keys), encoder_hidden_dims[-1], z_dim)
    params["enc_log_var"] = _init_linear(next(keys), encoder_hidden_dims[-1], z_dim)

    dec_dims = [z_dim] + list(decoder_hidden_dims)
    for i in range(len(dec_dims) - 1):
        params["dec"].append(_init_linear(next(keys), dec_dims[i], dec_dims[i + 1]))
    params["dec_out"] = _init_linear(next(keys), decoder_hidden_dims[-1], x_dim)
    return params


# --------------------------------------------------------------------------
# Padding helpers: zero-pad every feature dim to FPAD (lane-dense)
# --------------------------------------------------------------------------
def _pad_to(a, shape):
    return jnp.pad(a, [(0, t - s) for s, t in zip(a.shape, shape)])


def prepare_padded_params(params):
    """Flatten + zero-pad params into the order the fused kernel expects."""
    flat = []
    for w, b in params["enc_shared"]:
        flat.append(_pad_to(w, (FPAD, FPAD)))
        flat.append(_pad_to(b, (1, FPAD)))
    w_mu, b_mu = params["enc_mu"]
    w_lv, b_lv = params["enc_log_var"]
    # Fuse mu / log_var heads along Dout -> [FPAD, 2*FPAD]
    flat.append(jnp.concatenate(
        [_pad_to(w_mu, (FPAD, FPAD)), _pad_to(w_lv, (FPAD, FPAD))], axis=1))
    flat.append(jnp.concatenate(
        [_pad_to(b_mu, (1, FPAD)), _pad_to(b_lv, (1, FPAD))], axis=1))
    for w, b in params["dec"]:
        flat.append(_pad_to(w, (FPAD, FPAD)))
        flat.append(_pad_to(b, (1, FPAD)))
    w_o, b_o = params["dec_out"]
    flat.append(_pad_to(w_o, (FPAD, FPAD)))
    flat.append(_pad_to(b_o, (1, FPAD)))
    return tuple(flat)


# --------------------------------------------------------------------------
# Fused forward wrapper: single pallas_call, batch tiled over a parallel grid
# --------------------------------------------------------------------------
def vae_forward_pallas(padded_params, x, eps, *, n_enc, n_dec, x_dim, z_dim,
                       b_tile=128):
    B = x.shape[0]
    n_tiles = pl.cdiv(B, b_tile)
    Bp = n_tiles * b_tile

    # Zero-pad batch and feature dims (padded lanes stay exactly zero so the
    # zero-padded weight rows keep all padded contributions at 0).
    xp = jnp.zeros((Bp, FPAD), x.dtype).at[:B, :x_dim].set(x)
    epsp = jnp.zeros((Bp, FPAD), eps.dtype).at[:B, :z_dim].set(eps)

    batch_spec = pl.BlockSpec((b_tile, FPAD), lambda i: (i, 0))
    param_specs = [pl.BlockSpec(p.shape, lambda i: (0, 0)) for p in padded_params]

    kernel = functools.partial(_vae_fused_kernel, n_enc=n_enc, n_dec=n_dec)

    recon_p, mu_p, lv_p = pl.pallas_call(
        kernel,
        out_shape=(
            jax.ShapeDtypeStruct((Bp, FPAD), x.dtype),
            jax.ShapeDtypeStruct((Bp, FPAD), x.dtype),
            jax.ShapeDtypeStruct((Bp, FPAD), x.dtype),
        ),
        grid=(n_tiles,),
        in_specs=[batch_spec, batch_spec] + param_specs,
        out_specs=(
            pl.BlockSpec((b_tile, FPAD), lambda i: (i, 0)),
            pl.BlockSpec((b_tile, FPAD), lambda i: (i, 0)),
            pl.BlockSpec((b_tile, FPAD), lambda i: (i, 0)),
        ),
        compiler_params=pltpu.CompilerParams(
            dimension_semantics=("parallel",)),   # v7x: split batch over 2 TCs
    )(xp, epsp, *padded_params)

    # Slice back to logical shapes (drops zero-padded lanes / rows).
    return recon_p[:B, :x_dim], mu_p[:B, :z_dim], lv_p[:B, :z_dim]


# --------------------------------------------------------------------------
# Pure-JAX reference (for correctness check)
# --------------------------------------------------------------------------
def vae_forward_ref(params, x, eps):
    h = x
    for w, b in params["enc_shared"]:
        h = jnp.maximum(h @ w + b, 0.0)
    mu = h @ params["enc_mu"][0] + params["enc_mu"][1]
    lv = h @ params["enc_log_var"][0] + params["enc_log_var"][1]
    z = jnp.exp(0.5 * lv) * eps + mu
    d = z
    for w, b in params["dec"]:
        d = jnp.maximum(d @ w + b, 0.0)
    recon = jax.nn.sigmoid(d @ params["dec_out"][0] + params["dec_out"][1])
    return recon, mu, lv


# --------------------------------------------------------------------------
# Main
# --------------------------------------------------------------------------
if __name__ == "__main__":
    x_dim = 64
    z_dim = 8
    encoder_hidden_dims = [32, 16]
    decoder_hidden_dims = [16, 32]
    batch = 256          # amortizes launch cost; tiled 128 rows / grid step
    b_tile = 128

    key = jax.random.PRNGKey(0)
    k_param, k_x, k_eps = jax.random.split(key, 3)

    params = init_vae_params(k_param, x_dim, z_dim,
                             encoder_hidden_dims, decoder_hidden_dims)
    padded_params = prepare_padded_params(params)

    x = jax.random.uniform(k_x, (batch, x_dim), jnp.float32)      # pixel-like [0,1)
    eps = jax.random.normal(k_eps, (batch, z_dim), jnp.float32)   # eps ~ N(0,1)

    fwd = jax.jit(functools.partial(
        vae_forward_pallas,
        n_enc=len(encoder_hidden_dims), n_dec=len(decoder_hidden_dims),
        x_dim=x_dim, z_dim=z_dim, b_tile=b_tile))

    recon, mu, log_var = fwd(padded_params, x, eps)
    jax.block_until_ready((recon, mu, log_var))

    assert recon.shape == (batch, x_dim)
    assert mu.shape == (batch, z_dim)
    assert log_var.shape == (batch, z_dim)

    # Correctness vs pure-JAX reference
    r_ref, mu_ref, lv_ref = vae_forward_ref(params, x, eps)
    assert jnp.allclose(recon, r_ref, rtol=1e-5, atol=1e-5)
    assert jnp.allclose(mu, mu_ref, rtol=1e-5, atol=1e-5)
    assert jnp.allclose(log_var, lv_ref, rtol=1e-5, atol=1e-5)

    print("KERNEL_OK")
</pallas_src>

<mosaic_0001>
module attributes {stable_mosaic.version = 11 : i64} {
  func.func @_vae_fused_kernel(%arg0: i32, %arg1: memref<128x128xf32, #tpu.memory_space<vmem>>, %arg2: memref<128x128xf32, #tpu.memory_space<vmem>>, %arg3: memref<128x128xf32, #tpu.memory_space<vmem>>, %arg4: memref<1x128xf32, #tpu.memory_space<vmem>>, %arg5: memref<128x128xf32, #tpu.memory_space<vmem>>, %arg6: memref<1x128xf32, #tpu.memory_space<vmem>>, %arg7: memref<128x256xf32, #tpu.memory_space<vmem>>, %arg8: memref<1x256xf32, #tpu.memory_space<vmem>>, %arg9: memref<128x128xf32, #tpu.memory_space<vmem>>, %arg10: memref<1x128xf32, #tpu.memory_space<vmem>>, %arg11: memref<128x128xf32, #tpu.memory_space<vmem>>, %arg12: memref<1x128xf32, #tpu.memory_space<vmem>>, %arg13: memref<128x128xf32, #tpu.memory_space<vmem>>, %arg14: memref<1x128xf32, #tpu.memory_space<vmem>>, %arg15: memref<128x128xf32, #tpu.memory_space<vmem>>, %arg16: memref<128x128xf32, #tpu.memory_space<vmem>>, %arg17: memref<128x128xf32, #tpu.memory_space<vmem>>) attributes {dimension_semantics = [#tpu.dimension_semantics<parallel>], iteration_bounds = array<i64: 2>, scalar_prefetch = 0 : i64, scratch_operands = 0 : i64, tpu.core_type = #tpu.core_type<tc>, window_params = [{transform_indices = @transform_0, window_bounds = array<i64: 128, 128>}, {transform_indices = @transform_1, window_bounds = array<i64: 128, 128>}, {pipeline_mode = #tpu.pipeline_mode<synchronous>, transform_indices = @transform_2, window_bounds = array<i64: 128, 128>}, {pipeline_mode = #tpu.pipeline_mode<synchronous>, transform_indices = @transform_3, window_bounds = array<i64: 1, 128>}, {pipeline_mode = #tpu.pipeline_mode<synchronous>, transform_indices = @transform_4, window_bounds = array<i64: 128, 128>}, {pipeline_mode = #tpu.pipeline_mode<synchronous>, transform_indices = @transform_5, window_bounds = array<i64: 1, 128>}, {pipeline_mode = #tpu.pipeline_mode<synchronous>, transform_indices = @transform_6, window_bounds = array<i64: 128, 256>}, {pipeline_mode = #tpu.pipeline_mode<synchronous>, transform_indices = @transform_7, window_bounds = array<i64: 1, 256>}, {pipeline_mode = #tpu.pipeline_mode<synchronous>, transform_indices = @transform_8, window_bounds = array<i64: 128, 128>}, {pipeline_mode = #tpu.pipeline_mode<synchronous>, transform_indices = @transform_9, window_bounds = array<i64: 1, 128>}, {pipeline_mode = #tpu.pipeline_mode<synchronous>, transform_indices = @transform_10, window_bounds = array<i64: 128, 128>}, {pipeline_mode = #tpu.pipeline_mode<synchronous>, transform_indices = @transform_11, window_bounds = array<i64: 1, 128>}, {pipeline_mode = #tpu.pipeline_mode<synchronous>, transform_indices = @transform_12, window_bounds = array<i64: 128, 128>}, {pipeline_mode = #tpu.pipeline_mode<synchronous>, transform_indices = @transform_13, window_bounds = array<i64: 1, 128>}, {transform_indices = @transform_14, window_bounds = array<i64: 128, 128>}, {transform_indices = @transform_15, window_bounds = array<i64: 128, 128>}, {transform_indices = @transform_16, window_bounds = array<i64: 128, 128>}]} {
    %c0 = arith.constant 0 : index
    %c0_0 = arith.constant 0 : index
    %0 = vector.load %arg1[%c0, %c0_0] : memref<128x128xf32, #tpu.memory_space<vmem>>, vector<128x128xf32>
    %c0_1 = arith.constant 0 : index
    %c0_2 = arith.constant 0 : index
    %1 = vector.load %arg3[%c0_1, %c0_2] : memref<128x128xf32, #tpu.memory_space<vmem>>, vector<128x128xf32>
    %c0_3 = arith.constant 0 : index
    %c0_4 = arith.constant 0 : index
    %2 = vector.load %arg4[%c0_3, %c0_4] : memref<1x128xf32, #tpu.memory_space<vmem>>, vector<1x128xf32>
    %cst = arith.constant dense<0.000000e+00> : vector<128x128xf32>
    %3 = tpu.matmul %0, %1, %cst {dimension_numbers = #tpu.dot_dimension_numbers<[1], [0], [0], [1], [0, 0, 1, 1], [], []>} : vector<128x128xf32>, vector<128x128xf32>, vector<128x128xf32> -> vector<128x128xf32>
    %4 = vector.broadcast %2 : vector<1x128xf32> to vector<128x128xf32>
    %5 = arith.addf %3, %4 : vector<128x128xf32>
    %cst_5 = arith.constant 0.000000e+00 : f32
    %6 = vector.broadcast %cst_5 : f32 to vector<128x128xf32>
    %7 = arith.maximumf %5, %6 : vector<128x128xf32>
    %c0_6 = arith.constant 0 : index
    %c0_7 = arith.constant 0 : index
    %8 = vector.load %arg5[%c0_6, %c0_7] : memref<128x128xf32, #tpu.memory_space<vmem>>, vector<128x128xf32>
    %c0_8 = arith.constant 0 : index
    %c0_9 = arith.constant 0 : index
    %9 = vector.load %arg6[%c0_8, %c0_9] : memref<1x128xf32, #tpu.memory_space<vmem>>, vector<1x128xf32>
    %cst_10 = arith.constant dense<0.000000e+00> : vector<128x128xf32>
    %10 = tpu.matmul %7, %8, %cst_10 {dimension_numbers = #tpu.dot_dimension_numbers<[1], [0], [0], [1], [0, 0, 1, 1], [], []>} : vector<128x128xf32>, vector<128x128xf32>, vector<128x128xf32> -> vector<128x128xf32>
    %11 = vector.broadcast %9 : vector<1x128xf32> to vector<128x128xf32>
    %12 = arith.addf %10, %11 : vector<128x128xf32>
    %cst_11 = arith.constant 0.000000e+00 : f32
    %13 = vector.broadcast %cst_11 : f32 to vector<128x128xf32>
    %14 = arith.maximumf %12, %13 : vector<128x128xf32>
    %c0_12 = arith.constant 0 : index
    %c0_13 = arith.constant 0 : index
    %15 = vector.load %arg7[%c0_12, %c0_13] : memref<128x256xf32, #tpu.memory_space<vmem>>, vector<128x256xf32>
    %c0_14 = arith.constant 0 : index
    %c0_15 = arith.constant 0 : index
    %16 = vector.load %arg8[%c0_14, %c0_15] : memref<1x256xf32, #tpu.memory_space<vmem>>, vector<1x256xf32>
    %cst_16 = arith.constant dense<0.000000e+00> : vector<128x256xf32>
    %17 = tpu.matmul %14, %15, %cst_16 {dimension_numbers = #tpu.dot_dimension_numbers<[1], [0], [0], [1], [0, 0, 1, 1], [], []>} : vector<128x128xf32>, vector<128x256xf32>, vector<128x256xf32> -> vector<128x256xf32>
    %18 = vector.broadcast %16 : vector<1x256xf32> to vector<128x256xf32>
    %19 = arith.addf %17, %18 : vector<128x256xf32>
    %20 = vector.extract_strided_slice %19 {offsets = [0, 0], sizes = [128, 128], strides = [1, 1]} : vector<128x256xf32> to vector<128x128xf32>
    %21 = vector.extract_strided_slice %19 {offsets = [0, 128], sizes = [128, 128], strides = [1, 1]} : vector<128x256xf32> to vector<128x128xf32>
    %c0_17 = arith.constant 0 : index
    %c0_18 = arith.constant 0 : index
    %22 = vector.load %arg2[%c0_17, %c0_18] : memref<128x128xf32, #tpu.memory_space<vmem>>, vector<128x128xf32>
    %cst_19 = arith.constant 5.000000e-01 : f32
    %23 = vector.broadcast %cst_19 : f32 to vector<128x128xf32>
    %24 = arith.mulf %23, %21 : vector<128x128xf32>
    %25 = math.exp %24 : vector<128x128xf32>
    %26 = arith.mulf %25, %22 : vector<128x128xf32>
    %27 = arith.addf %26, %20 : vector<128x128xf32>
    %c0_20 = arith.constant 0 : index
    %c0_21 = arith.constant 0 : index
    %28 = vector.load %arg9[%c0_20, %c0_21] : memref<128x128xf32, #tpu.memory_space<vmem>>, vector<128x128xf32>
    %c0_22 = arith.constant 0 : index
    %c0_23 = arith.constant 0 : index
    %29 = vector.load %arg10[%c0_22, %c0_23] : memref<1x128xf32, #tpu.memory_space<vmem>>, vector<1x128xf32>
    %cst_24 = arith.constant dense<0.000000e+00> : vector<128x128xf32>
    %30 = tpu.matmul %27, %28, %cst_24 {dimension_numbers = #tpu.dot_dimension_numbers<[1], [0], [0], [1], [0, 0, 1, 1], [], []>} : vector<128x128xf32>, vector<128x128xf32>, vector<128x128xf32> -> vector<128x128xf32>
    %31 = vector.broadcast %29 : vector<1x128xf32> to vector<128x128xf32>
    %32 = arith.addf %30, %31 : vector<128x128xf32>
    %cst_25 = arith.constant 0.000000e+00 : f32
    %33 = vector.broadcast %cst_25 : f32 to vector<128x128xf32>
    %34 = arith.maximumf %32, %33 : vector<128x128xf32>
    %c0_26 = arith.constant 0 : index
    %c0_27 = arith.constant 0 : index
    %35 = vector.load %arg11[%c0_26, %c0_27] : memref<128x128xf32, #tpu.memory_space<vmem>>, vector<128x128xf32>
    %c0_28 = arith.constant 0 : index
    %c0_29 = arith.constant 0 : index
    %36 = vector.load %arg12[%c0_28, %c0_29] : memref<1x128xf32, #tpu.memory_space<vmem>>, vector<1x128xf32>
    %cst_30 = arith.constant dense<0.000000e+00> : vector<128x128xf32>
    %37 = tpu.matmul %34, %35, %cst_30 {dimension_numbers = #tpu.dot_dimension_numbers<[1], [0], [0], [1], [0, 0, 1, 1], [], []>} : vector<128x128xf32>, vector<128x128xf32>, vector<128x128xf32> -> vector<128x128xf32>
    %38 = vector.broadcast %36 : vector<1x128xf32> to vector<128x128xf32>
    %39 = arith.addf %37, %38 : vector<128x128xf32>
    %cst_31 = arith.constant 0.000000e+00 : f32
    %40 = vector.broadcast %cst_31 : f32 to vector<128x128xf32>
    %41 = arith.maximumf %39, %40 : vector<128x128xf32>
    %c0_32 = arith.constant 0 : index
    %c0_33 = arith.constant 0 : index
    %42 = vector.load %arg13[%c0_32, %c0_33] : memref<128x128xf32, #tpu.memory_space<vmem>>, vector<128x128xf32>
    %c0_34 = arith.constant 0 : index
    %c0_35 = arith.constant 0 : index
    %43 = vector.load %arg14[%c0_34, %c0_35] : memref<1x128xf32, #tpu.memory_space<vmem>>, vector<1x128xf32>
    %cst_36 = arith.constant dense<0.000000e+00> : vector<128x128xf32>
    %44 = tpu.matmul %41, %42, %cst_36 {dimension_numbers = #tpu.dot_dimension_numbers<[1], [0], [0], [1], [0, 0, 1, 1], [], []>} : vector<128x128xf32>, vector<128x128xf32>, vector<128x128xf32> -> vector<128x128xf32>
    %45 = vector.broadcast %43 : vector<1x128xf32> to vector<128x128xf32>
    %46 = arith.addf %44, %45 : vector<128x128xf32>
    %47 = arith.negf %46 : vector<128x128xf32>
    %48 = math.exp %47 : vector<128x128xf32>
    %cst_37 = arith.constant 1.000000e+00 : f32
    %49 = vector.broadcast %cst_37 : f32 to vector<128x128xf32>
    %50 = arith.addf %49, %48 : vector<128x128xf32>
    %51 = arith.divf %49, %50 : vector<128x128xf32>
    %c0_38 = arith.constant 0 : index
    %c0_39 = arith.constant 0 : index
    %52 = vector.load %arg15[%c0_38, %c0_39] : memref<128x128xf32, #tpu.memory_space<vmem>>, vector<128x128xf32>
    tpu.vector_store %arg15[%c0_38, %c0_39], %51 {strides = array<i32>} : memref<128x128xf32, #tpu.memory_space<vmem>>, vector<128x128xf32>,
    %c0_40 = arith.constant 0 : index
    %c0_41 = arith.constant 0 : index
    %53 = vector.load %arg16[%c0_40, %c0_41] : memref<128x128xf32, #tpu.memory_space<vmem>>, vector<128x128xf32>
    tpu.vector_store %arg16[%c0_40, %c0_41], %20 {strides = array<i32>} : memref<128x128xf32, #tpu.memory_space<vmem>>, vector<128x128xf32>,
    %c0_42 = arith.constant 0 : index
    %c0_43 = arith.constant 0 : index
    %54 = vector.load %arg17[%c0_42, %c0_43] : memref<128x128xf32, #tpu.memory_space<vmem>>, vector<128x128xf32>
    tpu.vector_store %arg17[%c0_42, %c0_43], %21 {strides = array<i32>} : memref<128x128xf32, #tpu.memory_space<vmem>>, vector<128x128xf32>,
    return
  }
  func.func @transform_0(%arg0: i32) -> (i32, i32) {
    %c0_i32 = arith.constant 0 : i32
    %c0_i32_0 = arith.constant 0 : i32
    return %arg0, %c0_i32 : i32, i32
  }
  func.func @transform_1(%arg0: i32) -> (i32, i32) {
    %c0_i32 = arith.constant 0 : i32
    %c0_i32_0 = arith.constant 0 : i32
    return %arg0, %c0_i32 : i32, i32
  }
  func.func @transform_2(%arg0: i32) -> (i32, i32) {
    %c0_i32 = arith.constant 0 : i32
    %c0_i32_0 = arith.constant 0 : i32
    %c0_i32_1 = arith.constant 0 : i32
    return %c0_i32, %c0_i32_0 : i32, i32
  }
  func.func @transform_3(%arg0: i32) -> (i32, i32) {
    %c0_i32 = arith.constant 0 : i32
    %c0_i32_0 = arith.constant 0 : i32
    %c0_i32_1 = arith.constant 0 : i32
    return %c0_i32, %c0_i32_0 : i32, i32
  }
  func.func @transform_4(%arg0: i32) -> (i32, i32) {
    %c0_i32 = arith.constant 0 : i32
    %c0_i32_0 = arith.constant 0 : i32
    %c0_i32_1 = arith.constant 0 : i32
    return %c0_i32, %c0_i32_0 : i32, i32
  }
  func.func @transform_5(%arg0: i32) -> (i32, i32) {
    %c0_i32 = arith.constant 0 : i32
    %c0_i32_0 = arith.constant 0 : i32
    %c0_i32_1 = arith.constant 0 : i32
    return %c0_i32, %c0_i32_0 : i32, i32
  }
  func.func @transform_6(%arg0: i32) -> (i32, i32) {
    %c0_i32 = arith.constant 0 : i32
    %c0_i32_0 = arith.constant 0 : i32
    %c0_i32_1 = arith.constant 0 : i32
    return %c0_i32, %c0_i32_0 : i32, i32
  }
  func.func @transform_7(%arg0: i32) -> (i32, i32) {
    %c0_i32 = arith.constant 0 : i32
    %c0_i32_0 = arith.constant 0 : i32
    %c0_i32_1 = arith.constant 0 : i32
    return %c0_i32, %c0_i32_0 : i32, i32
  }
  func.func @transform_8(%arg0: i32) -> (i32, i32) {
    %c0_i32 = arith.constant 0 : i32
    %c0_i32_0 = arith.constant 0 : i32
    %c0_i32_1 = arith.constant 0 : i32
    return %c0_i32, %c0_i32_0 : i32, i32
  }
  func.func @transform_9(%arg0: i32) -> (i32, i32) {
    %c0_i32 = arith.constant 0 : i32
    %c0_i32_0 = arith.constant 0 : i32
    %c0_i32_1 = arith.constant 0 : i32
    return %c0_i32, %c0_i32_0 : i32, i32
  }
  func.func @transform_10(%arg0: i32) -> (i32, i32) {
    %c0_i32 = arith.constant 0 : i32
    %c0_i32_0 = arith.constant 0 : i32
    %c0_i32_1 = arith.constant 0 : i32
    return %c0_i32, %c0_i32_0 : i32, i32
  }
  func.func @transform_11(%arg0: i32) -> (i32, i32) {
    %c0_i32 = arith.constant 0 : i32
    %c0_i32_0 = arith.constant 0 : i32
    %c0_i32_1 = arith.constant 0 : i32
    return %c0_i32, %c0_i32_0 : i32, i32
  }
  func.func @transform_12(%arg0: i32) -> (i32, i32) {
    %c0_i32 = arith.constant 0 : i32
    %c0_i32_0 = arith.constant 0 : i32
    %c0_i32_1 = arith.constant 0 : i32
    return %c0_i32, %c0_i32_0 : i32, i32
  }
  func.func @transform_13(%arg0: i32) -> (i32, i32) {
    %c0_i32 = arith.constant 0 : i32
    %c0_i32_0 = arith.constant 0 : i32
    %c0_i32_1 = arith.constant 0 : i32
    return %c0_i32, %c0_i32_0 : i32, i32
  }
  func.func @transform_14(%arg0: i32) -> (i32, i32) {
    %c0_i32 = arith.constant 0 : i32
    %c0_i32_0 = arith.constant 0 : i32
    return %arg0, %c0_i32 : i32, i32
  }
  func.func @transform_15(%arg0: i32) -> (i32, i32) {
    %c0_i32 = arith.constant 0 : i32
    %c0_i32_0 = arith.constant 0 : i32
    return %arg0, %c0_i32 : i32, i32
  }
  func.func @transform_16(%arg0: i32) -> (i32, i32) {
    %c0_i32 = arith.constant 0 : i32
    %c0_i32_0 = arith.constant 0 : i32
    return %arg0, %c0_i32 : i32, i32
  }
}

</mosaic_0001>

<llo_original>
// kernel: vae_forward_pallas.1
$region0: #{vae_forward_pallas.1}
  #allocation0 [shape = 'u32[]', space=smem, size = 0x4, offset = 0x4, fixed_abs, tag = 'smem constant byte address 0x4 - core index']
  #allocation1 [shape = 'u32[144,128]{1,0:T(1,128)}', space=vmem, size = 0x12000, scoped, tag = 'internal scratch']
  %s0 = inlined_call_operand.vmem [shape: f32[256,128], index: 0, kind: input, shape index: {}]
  %s1 = inlined_call_operand.vmem [shape: f32[256,128], index: 1, kind: input, shape index: {}]
  %s2 = inlined_call_operand.vmem [shape: f32[128,128], index: 2, kind: input, shape index: {}]
  %s3 = inlined_call_operand.vmem [shape: f32[1,128], index: 3, kind: input, shape index: {}]
  %s4 = inlined_call_operand.vmem [shape: f32[128,128], index: 4, kind: input, shape index: {}]
  %s5 = inlined_call_operand.vmem [shape: f32[1,128], index: 5, kind: input, shape index: {}]
  %s6 = inlined_call_operand.vmem [shape: f32[128,256], index: 6, kind: input, shape index: {}]
  %s7 = inlined_call_operand.vmem [shape: f32[1,256], index: 7, kind: input, shape index: {}]
  %s8 = inlined_call_operand.vmem [shape: f32[128,128], index: 8, kind: input, shape index: {}]
  %s9 = inlined_call_operand.vmem [shape: f32[1,128], index: 9, kind: input, shape index: {}]
  %s10 = inlined_call_operand.vmem [shape: f32[128,128], index: 10, kind: input, shape index: {}]
  %s11 = inlined_call_operand.vmem [shape: f32[1,128], index: 11, kind: input, shape index: {}]
  %s12 = inlined_call_operand.vmem [shape: f32[128,128], index: 12, kind: input, shape index: {}]
  %s13 = inlined_call_operand.vmem [shape: f32[1,128], index: 13, kind: input, shape index: {}]
  %s14 = inlined_call_operand.vmem [shape: f32[256,128], index: 14, kind: output, shape index: {0}]
  %s15 = inlined_call_operand.vmem [shape: f32[256,128], index: 15, kind: output, shape index: {1}]
  %s16 = inlined_call_operand.vmem [shape: f32[256,128], index: 16, kind: output, shape index: {2}]
  %17 = xla_tuple %s14, %s15, %s16
  %s18 = sld [smem:[#allocation0]]
  $region105: #{vae_forward_pallas.1} parent=0
    _
  %s20 = ssub.s32 1, %s18
  %s21 = scalar_select 0, %s20, %s18
  loop: start=0, step=1, limit=4
  $region2: #{vae_forward_pallas.1} parent=0 // loop_pre_header
    _
  $region3: #{vae_forward_pallas.1} parent=0 // loop_header
    %s23 = sphi 0, %s27
    %p24 = scmp.ge.s32.totalorder %s23, 4
    %s33 = sphi 0, %s35
    %s36 = sphi 0, %s33
    %s37 = sphi 0, %s36
    %s53 = sphi 0, %s37
    %s59 = sphi 0, %s61
    %s62 = sphi 0, %s59
    %s63 = sphi 0, %s62
    %s79 = sphi 0, %s63
    %s83 = sphi 0, %s83
    %s85 = sphi 0, %s83
    %s86 = sphi 0, %s85
    %s100 = sphi 0, %s86
    %s104 = sphi 0, %s104
    %s106 = sphi 0, %s104
    %s107 = sphi 0, %s106
    %s121 = sphi 0, %s107
    %s125 = sphi 0, %s125
    %s127 = sphi 0, %s125
    %s128 = sphi 0, %s127
    %s142 = sphi 0, %s128
    %s146 = sphi 0, %s146
    %s148 = sphi 0, %s146
    %s149 = sphi 0, %s148
    %s163 = sphi 0, %s149
    %s167 = sphi 0, %s167
    %s169 = sphi 0, %s167
    %s170 = sphi 0, %s169
    %s184 = sphi 0, %s170
    %s188 = sphi 0, %s188
    %s190 = sphi 0, %s188
    %s191 = sphi 0, %s190
    %s205 = sphi 0, %s191
    %s209 = sphi 0, %s209
    %s211 = sphi 0, %s209
    %s212 = sphi 0, %s211
    %s226 = sphi 0, %s212
    %s230 = sphi 0, %s230
    %s232 = sphi 0, %s230
    %s233 = sphi 0, %s232
    %s247 = sphi 0, %s233
    %s251 = sphi 0, %s251
    %s253 = sphi 0, %s251
    %s254 = sphi 0, %s253
    %s268 = sphi 0, %s254
    %s272 = sphi 0, %s272
    %s274 = sphi 0, %s272
    %s275 = sphi 0, %s274
    %s289 = sphi 0, %s275
    %s293 = sphi 0, %s293
    %s295 = sphi 0, %s293
    %s296 = sphi 0, %s295
    %s310 = sphi 0, %s296
    %s314 = sphi 0, %s314
    %s316 = sphi 0, %s314
    %s317 = sphi 0, %s316
    %s331 = sphi 0, %s317
    %s337 = sphi 0, %s339
    %s340 = sphi 0, %s337
    %s341 = sphi 0, %s340
    %s357 = sphi 0, %s341
    %s363 = sphi 0, %s365
    %s366 = sphi 0, %s363
    %s367 = sphi 0, %s366
    %s383 = sphi 0, %s367
    %s389 = sphi 0, %s391
    %s392 = sphi 0, %s389
    %s393 = sphi 0, %s392
    %s409 = sphi 0, %s393
  $region4: #{vae_forward_pallas.1} parent=0 // loop_header_branch
    %26 = sbr.rel (%p24) target = $region8
  $region5: #{vae_forward_pallas.1} parent=0 // loop_body
    %s28 = ssub.s32 %s23, 1
    %s29 = ssub.s32 %s23, 2
    %s30 = sadd.s32 %s23, 1
    %s31 = ssub.s32 %s23, %s30
    %p32 = scmp.eq.s32.totalorder %s31, 0
    %s34 = sadd.s32 %s33, 1
    %s35 = scalar_select %p32, %s33, %s34
    %p38 = pneg %p32
    %p39 = scmp.eq.s32.totalorder %s23, 1
    %p40 = por %p38, %p39
    %p41 = scmp.ne.s32.totalorder %s33, %s36
    %p42 = scmp.eq.s32.totalorder %s23, 0
    %p43 = por %p41, %p42
    %p44 = scmp.ne.s32.totalorder %s33, %s36
    %p45 = scmp.eq.s32.totalorder %s28, 1
    %p46 = por %p44, %p45
    %p47 = scmp.ne.s32.totalorder %s36, %s37
    %p48 = scmp.eq.s32.totalorder %s28, 0
    %p49 = por %p47, %p48
    %p50 = scmp.ne.s32.totalorder %s36, %s37
    %p51 = scmp.eq.s32.totalorder %s29, 1
    %p52 = por %p50, %p51
    %p54 = scmp.ne.s32.totalorder %s37, %s53
    %p55 = scmp.eq.s32.totalorder %s29, 0
    %p56 = por %p54, %p55
    %s57 = ssub.s32 %s23, %s30
    %p58 = scmp.eq.s32.totalorder %s57, 0
    %s60 = sadd.s32 %s59, 1
    %s61 = scalar_select %p58, %s59, %s60
    %p64 = pneg %p58
    %p65 = scmp.eq.s32.totalorder %s23, 1
    %p66 = por %p64, %p65
    %p67 = scmp.ne.s32.totalorder %s59, %s62
    %p68 = scmp.eq.s32.totalorder %s23, 0
    %p69 = por %p67, %p68
    %p70 = scmp.ne.s32.totalorder %s59, %s62
    %p71 = scmp.eq.s32.totalorder %s28, 1
    %p72 = por %p70, %p71
    %p73 = scmp.ne.s32.totalorder %s62, %s63
    %p74 = scmp.eq.s32.totalorder %s28, 0
    %p75 = por %p73, %p74
    %p76 = scmp.ne.s32.totalorder %s62, %s63
    %p77 = scmp.eq.s32.totalorder %s29, 1
    %p78 = por %p76, %p77
    %p80 = scmp.ne.s32.totalorder %s63, %s79
    %p81 = scmp.eq.s32.totalorder %s29, 0
    %p82 = por %p80, %p81
    %s84 = sadd.s32 %s83, 1
    %p87 = scmp.eq.s32.totalorder %s23, 1
    %p88 = scmp.ne.s32.totalorder %s83, %s85
    %p89 = scmp.eq.s32.totalorder %s23, 0
    %p90 = por %p88, %p89
    %p91 = scmp.ne.s32.totalorder %s83, %s85
    %p92 = scmp.eq.s32.totalorder %s28, 1
    %p93 = por %p91, %p92
    %p94 = scmp.ne.s32.totalorder %s85, %s86
    %p95 = scmp.eq.s32.totalorder %s28, 0
    %p96 = por %p94, %p95
    %p97 = scmp.ne.s32.totalorder %s85, %s86
    %p98 = scmp.eq.s32.totalorder %s29, 1
    %p99 = por %p97, %p98
    %p101 = scmp.ne.s32.totalorder %s86, %s100
    %p102 = scmp.eq.s32.totalorder %s29, 0
    %p103 = por %p101, %p102
    %s105 = sadd.s32 %s104, 1
    %p108 = scmp.eq.s32.totalorder %s23, 1
    %p109 = scmp.ne.s32.totalorder %s104, %s106
    %p110 = scmp.eq.s32.totalorder %s23, 0
    %p111 = por %p109, %p110
    %p112 = scmp.ne.s32.totalorder %s104, %s106
    %p113 = scmp.eq.s32.totalorder %s28, 1
    %p114 = por %p112, %p113
    %p115 = scmp.ne.s32.totalorder %s106, %s107
    %p116 = scmp.eq.s32.totalorder %s28, 0
    %p117 = por %p115, %p116
    %p118 = scmp.ne.s32.totalorder %s106, %s107
    %p119 = scmp.eq.s32.totalorder %s29, 1
    %p120 = por %p118, %p119
    %p122 = scmp.ne.s32.totalorder %s107, %s121
    %p123 = scmp.eq.s32.totalorder %s29, 0
    %p124 = por %p122, %p123
    %s126 = sadd.s32 %s125, 1
    %p129 = scmp.eq.s32.totalorder %s23, 1
    %p130 = scmp.ne.s32.totalorder %s125, %s127
    %p131 = scmp.eq.s32.totalorder %s23, 0
    %p132 = por %p130, %p131
    %p133 = scmp.ne.s32.totalorder %s125, %s127
    %p134 = scmp.eq.s32.totalorder %s28, 1
    %p135 = por %p133, %p134
    %p136 = scmp.ne.s32.totalorder %s127, %s128
    %p137 = scmp.eq.s32.totalorder %s28, 0
    %p138 = por %p136, %p137
    %p139 = scmp.ne.s32.totalorder %s127, %s128
    %p140 = scmp.eq.s32.totalorder %s29, 1
    %p141 = por %p139, %p140
    %p143 = scmp.ne.s32.totalorder %s128, %s142
    %p144 = scmp.eq.s32.totalorder %s29, 0
    %p145 = por %p143, %p144
    %s147 = sadd.s32 %s146, 1
    %p150 = scmp.eq.s32.totalorder %s23, 1
    %p151 = scmp.ne.s32.totalorder %s146, %s148
    %p152 = scmp.eq.s32.totalorder %s23, 0
    %p153 = por %p151, %p152
    %p154 = scmp.ne.s32.totalorder %s146, %s148
    %p155 = scmp.eq.s32.totalorder %s28, 1
    %p156 = por %p154, %p155
    %p157 = scmp.ne.s32.totalorder %s148, %s149
    %p158 = scmp.eq.s32.totalorder %s28, 0
    %p159 = por %p157, %p158
    %p160 = scmp.ne.s32.totalorder %s148, %s149
    %p161 = scmp.eq.s32.totalorder %s29, 1
    %p162 = por %p160, %p161
    %p164 = scmp.ne.s32.totalorder %s149, %s163
    %p165 = scmp.eq.s32.totalorder %s29, 0
    %p166 = por %p164, %p165
    %s168 = sadd.s32 %s167, 1
    %p171 = scmp.eq.s32.totalorder %s23, 1
    %p172 = scmp.ne.s32.totalorder %s167, %s169
    %p173 = scmp.eq.s32.totalorder %s23, 0
    %p174 = por %p172, %p173
    %p175 = scmp.ne.s32.totalorder %s167, %s169
    %p176 = scmp.eq.s32.totalorder %s28, 1
    %p177 = por %p175, %p176
    %p178 = scmp.ne.s32.totalorder %s169, %s170
    %p179 = scmp.eq.s32.totalorder %s28, 0
    %p180 = por %p178, %p179
    %p181 = scmp.ne.s32.totalorder %s169, %s170
    %p182 = scmp.eq.s32.totalorder %s29, 1
    %p183 = por %p181, %p182
    %p185 = scmp.ne.s32.totalorder %s170, %s184
    %p186 = scmp.eq.s32.totalorder %s29, 0
    %p187 = por %p185, %p186
    %s189 = sadd.s32 %s188, 1
    %p192 = scmp.eq.s32.totalorder %s23, 1
    %p193 = scmp.ne.s32.totalorder %s188, %s190
    %p194 = scmp.eq.s32.totalorder %s23, 0
    %p195 = por %p193, %p194
    %p196 = scmp.ne.s32.totalorder %s188, %s190
    %p197 = scmp.eq.s32.totalorder %s28, 1
    %p198 = por %p196, %p197
    %p199 = scmp.ne.s32.totalorder %s190, %s191
    %p200 = scmp.eq.s32.totalorder %s28, 0
    %p201 = por %p199, %p200
    %p202 = scmp.ne.s32.totalorder %s190, %s191
    %p203 = scmp.eq.s32.totalorder %s29, 1
    %p204 = por %p202, %p203
    %p206 = scmp.ne.s32.totalorder %s191, %s205
    %p207 = scmp.eq.s32.totalorder %s29, 0
    %p208 = por %p206, %p207
    %s210 = sadd.s32 %s209, 1
    %p213 = scmp.eq.s32.totalorder %s23, 1
    %p214 = scmp.ne.s32.totalorder %s209, %s211
    %p215 = scmp.eq.s32.totalorder %s23, 0
    %p216 = por %p214, %p215
    %p217 = scmp.ne.s32.totalorder %s209, %s211
    %p218 = scmp.eq.s32.totalorder %s28, 1
    %p219 = por %p217, %p218
    %p220 = scmp.ne.s32.totalorder %s211, %s212
    %p221 = scmp.eq.s32.totalorder %s28, 0
    %p222 = por %p220, %p221
    %p223 = scmp.ne.s32.totalorder %s211, %s212
    %p224 = scmp.eq.s32.totalorder %s29, 1
    %p225 = por %p223, %p224
    %p227 = scmp.ne.s32.totalorder %s212, %s226
    %p228 = scmp.eq.s32.totalorder %s29, 0
    %p229 = por %p227, %p228
    %s231 = sadd.s32 %s230, 1
    %p234 = scmp.eq.s32.totalorder %s23, 1
    %p235 = scmp.ne.s32.totalorder %s230, %s232
    %p236 = scmp.eq.s32.totalorder %s23, 0
    %p237 = por %p235, %p236
    %p238 = scmp.ne.s32.totalorder %s230, %s232
    %p239 = scmp.eq.s32.totalorder %s28, 1
    %p240 = por %p238, %p239
    %p241 = scmp.ne.s32.totalorder %s232, %s233
    %p242 = scmp.eq.s32.totalorder %s28, 0
    %p243 = por %p241, %p242
    %p244 = scmp.ne.s32.totalorder %s232, %s233
    %p245 = scmp.eq.s32.totalorder %s29, 1
    %p246 = por %p244, %p245
    %p248 = scmp.ne.s32.totalorder %s233, %s247
    %p249 = scmp.eq.s32.totalorder %s29, 0
    %p250 = por %p248, %p249
    %s252 = sadd.s32 %s251, 1
    %p255 = scmp.eq.s32.totalorder %s23, 1
    %p256 = scmp.ne.s32.totalorder %s251, %s253
    %p257 = scmp.eq.s32.totalorder %s23, 0
    %p258 = por %p256, %p257
    %p259 = scmp.ne.s32.totalorder %s251, %s253
    %p260 = scmp.eq.s32.totalorder %s28, 1
    %p261 = por %p259, %p260
    %p262 = scmp.ne.s32.totalorder %s253, %s254
    %p263 = scmp.eq.s32.totalorder %s28, 0
    %p264 = por %p262, %p263
    %p265 = scmp.ne.s32.totalorder %s253, %s254
    %p266 = scmp.eq.s32.totalorder %s29, 1
    %p267 = por %p265, %p266
    %p269 = scmp.ne.s32.totalorder %s254, %s268
    %p270 = scmp.eq.s32.totalorder %s29, 0
    %p271 = por %p269, %p270
    %s273 = sadd.s32 %s272, 1
    %p276 = scmp.eq.s32.totalorder %s23, 1
    %p277 = scmp.ne.s32.totalorder %s272, %s274
    %p278 = scmp.eq.s32.totalorder %s23, 0
    %p279 = por %p277, %p278
    %p280 = scmp.ne.s32.totalorder %s272, %s274
    %p281 = scmp.eq.s32.totalorder %s28, 1
    %p282 = por %p280, %p281
    %p283 = scmp.ne.s32.totalorder %s274, %s275
    %p284 = scmp.eq.s32.totalorder %s28, 0
    %p285 = por %p283, %p284
    %p286 = scmp.ne.s32.totalorder %s274, %s275
    %p287 = scmp.eq.s32.totalorder %s29, 1
    %p288 = por %p286, %p287
    %p290 = scmp.ne.s32.totalorder %s275, %s289
    %p291 = scmp.eq.s32.totalorder %s29, 0
    %p292 = por %p290, %p291
    %s294 = sadd.s32 %s293, 1
    %p297 = scmp.eq.s32.totalorder %s23, 1
    %p298 = scmp.ne.s32.totalorder %s293, %s295
    %p299 = scmp.eq.s32.totalorder %s23, 0
    %p300 = por %p298, %p299
    %p301 = scmp.ne.s32.totalorder %s293, %s295
    %p302 = scmp.eq.s32.totalorder %s28, 1
    %p303 = por %p301, %p302
    %p304 = scmp.ne.s32.totalorder %s295, %s296
    %p305 = scmp.eq.s32.totalorder %s28, 0
    %p306 = por %p304, %p305
    %p307 = scmp.ne.s32.totalorder %s295, %s296
    %p308 = scmp.eq.s32.totalorder %s29, 1
    %p309 = por %p307, %p308
    %p311 = scmp.ne.s32.totalorder %s296, %s310
    %p312 = scmp.eq.s32.totalorder %s29, 0
    %p313 = por %p311, %p312
    %s315 = sadd.s32 %s314, 1
    %p318 = scmp.eq.s32.totalorder %s23, 1
    %p319 = scmp.ne.s32.totalorder %s314, %s316
    %p320 = scmp.eq.s32.totalorder %s23, 0
    %p321 = por %p319, %p320
    %p322 = scmp.ne.s32.totalorder %s314, %s316
    %p323 = scmp.eq.s32.totalorder %s28, 1
    %p324 = por %p322, %p323
    %p325 = scmp.ne.s32.totalorder %s316, %s317
    %p326 = scmp.eq.s32.totalorder %s28, 0
    %p327 = por %p325, %p326
    %p328 = scmp.ne.s32.totalorder %s316, %s317
    %p329 = scmp.eq.s32.totalorder %s29, 1
    %p330 = por %p328, %p329
    %p332 = scmp.ne.s32.totalorder %s317, %s331
    %p333 = scmp.eq.s32.totalorder %s29, 0
    %p334 = por %p332, %p333
    %s335 = ssub.s32 %s23, %s30
    %p336 = scmp.eq.s32.totalorder %s335, 0
    %s338 = sadd.s32 %s337, 1
    %s339 = scalar_select %p336, %s337, %s338
    %p342 = pneg %p336
    %p343 = scmp.eq.s32.totalorder %s23, 1
    %p344 = por %p342, %p343
    %p345 = scmp.ne.s32.totalorder %s337, %s340
    %p346 = scmp.eq.s32.totalorder %s23, 0
    %p347 = por %p345, %p346
    %p348 = scmp.ne.s32.totalorder %s337, %s340
    %p349 = scmp.eq.s32.totalorder %s28, 1
    %p350 = por %p348, %p349
    %p351 = scmp.ne.s32.totalorder %s340, %s341
    %p352 = scmp.eq.s32.totalorder %s28, 0
    %p353 = por %p351, %p352
    %p354 = scmp.ne.s32.totalorder %s340, %s341
    %p355 = scmp.eq.s32.totalorder %s29, 1
    %p356 = por %p354, %p355
    %p358 = scmp.ne.s32.totalorder %s341, %s357
    %p359 = scmp.eq.s32.totalorder %s29, 0
    %p360 = por %p358, %p359
    %s361 = ssub.s32 %s23, %s30
    %p362 = scmp.eq.s32.totalorder %s361, 0
    %s364 = sadd.s32 %s363, 1
    %s365 = scalar_select %p362, %s363, %s364
    %p368 = pneg %p362
    %p369 = scmp.eq.s32.totalorder %s23, 1
    %p370 = por %p368, %p369
    %p371 = scmp.ne.s32.totalorder %s363, %s366
    %p372 = scmp.eq.s32.totalorder %s23, 0
    %p373 = por %p371, %p372
    %p374 = scmp.ne.s32.totalorder %s363, %s366
    %p375 = scmp.eq.s32.totalorder %s28, 1
    %p376 = por %p374, %p375
    %p377 = scmp.ne.s32.totalorder %s366, %s367
    %p378 = scmp.eq.s32.totalorder %s28, 0
    %p379 = por %p377, %p378
    %p380 = scmp.ne.s32.totalorder %s366, %s367
    %p381 = scmp.eq.s32.totalorder %s29, 1
    %p382 = por %p380, %p381
    %p384 = scmp.ne.s32.totalorder %s367, %s383
    %p385 = scmp.eq.s32.totalorder %s29, 0
    %p386 = por %p384, %p385
    %s387 = ssub.s32 %s23, %s30
    %p388 = scmp.eq.s32.totalorder %s387, 0
    %s390 = sadd.s32 %s389, 1
    %s391 = scalar_select %p388, %s389, %s390
    %p394 = pneg %p388
    %p395 = scmp.eq.s32.totalorder %s23, 1
    %p396 = por %p394, %p395
    %p397 = scmp.ne.s32.totalorder %s389, %s392
    %p398 = scmp.eq.s32.totalorder %s23, 0
    %p399 = por %p397, %p398
    %p400 = scmp.ne.s32.totalorder %s389, %s392
    %p401 = scmp.eq.s32.totalorder %s28, 1
    %p402 = por %p400, %p401
    %p403 = scmp.ne.s32.totalorder %s392, %s393
    %p404 = scmp.eq.s32.totalorder %s28, 0
    %p405 = por %p403, %p404
    %p406 = scmp.ne.s32.totalorder %s392, %s393
    %p407 = scmp.eq.s32.totalorder %s29, 1
    %p408 = por %p406, %p407
    %p410 = scmp.ne.s32.totalorder %s393, %s409
    %p411 = scmp.eq.s32.totalorder %s29, 0
    %p412 = por %p410, %p411
    %p413 = scmp.le.s32.totalorder 1, %s23
    %p414 = scmp.lt.s32.totalorder %s23, 3
    %p415 = pnand %p413, %p414
    %p416 = pneg %p415
    // Predicated region
    $region9: #{vae_forward_pallas.1} parent=5 // pred_check
      _
    $region10: #{vae_forward_pallas.1} parent=5 // pred_check_branch
      %418 = sbr.rel (%p415) target = $region12
    $region11: #{vae_forward_pallas.1} parent=5 // pred_region
      %s419 = ssub.s32 %s23, 1
      // Predicated region
      $region13: #{vae_forward_pallas.1} parent=11 // pred_check
        %p420 = pneg %p96
      $region14: #{vae_forward_pallas.1} parent=11 // pred_check_branch
        %422 = sbr.rel (%p420) target = $region16
      $region15: #{vae_forward_pallas.1} parent=11 // pred_region
        _
      $region16: #{vae_forward_pallas.1} parent=11 // pred_fallthru
        _
      // Predicated region
      $region17: #{vae_forward_pallas.1} parent=11 // pred_check
        %p423 = pneg %p117
      $region18: #{vae_forward_pallas.1} parent=11 // pred_check_branch
        %425 = sbr.rel (%p423) target = $region20
      $region19: #{vae_forward_pallas.1} parent=11 // pred_region
        _
      $region20: #{vae_forward_pallas.1} parent=11 // pred_fallthru
        _
      // Predicated region
      $region21: #{vae_forward_pallas.1} parent=11 // pred_check
        %p426 = pneg %p138
      $region22: #{vae_forward_pallas.1} parent=11 // pred_check_branch
        %428 = sbr.rel (%p426) target = $region24
      $region23: #{vae_forward_pallas.1} parent=11 // pred_region
        _
      $region24: #{vae_forward_pallas.1} parent=11 // pred_fallthru
        _
      // Predicated region
      $region25: #{vae_forward_pallas.1} parent=11 // pred_check
        %p429 = pneg %p159
      $region26: #{vae_forward_pallas.1} parent=11 // pred_check_branch
        %431 = sbr.rel (%p429) target = $region28
      $region27: #{vae_forward_pallas.1} parent=11 // pred_region
        _
      $region28: #{vae_forward_pallas.1} parent=11 // pred_fallthru
        _
      // Predicated region
      $region29: #{vae_forward_pallas.1} parent=11 // pred_check
        %p432 = pneg %p180
      $region30: #{vae_forward_pallas.1} parent=11 // pred_check_branch
        %434 = sbr.rel (%p432) target = $region32
      $region31: #{vae_forward_pallas.1} parent=11 // pred_region
        _
      $region32: #{vae_forward_pallas.1} parent=11 // pred_fallthru
        _
      // Predicated region
      $region33: #{vae_forward_pallas.1} parent=11 // pred_check
        %p435 = pneg %p201
      $region34: #{vae_forward_pallas.1} parent=11 // pred_check_branch
        %437 = sbr.rel (%p435) target = $region36
      $region35: #{vae_forward_pallas.1} parent=11 // pred_region
        _
      $region36: #{vae_forward_pallas.1} parent=11 // pred_fallthru
        _
      // Predicated region
      $region37: #{vae_forward_pallas.1} parent=11 // pred_check
        %p438 = pneg %p222
      $region38: #{vae_forward_pallas.1} parent=11 // pred_check_branch
        %440 = sbr.rel (%p438) target = $region40
      $region39: #{vae_forward_pallas.1} parent=11 // pred_region
        _
      $region40: #{vae_forward_pallas.1} parent=11 // pred_fallthru
        _
      // Predicated region
      $region41: #{vae_forward_pallas.1} parent=11 // pred_check
        %p441 = pneg %p243
      $region42: #{vae_forward_pallas.1} parent=11 // pred_check_branch
        %443 = sbr.rel (%p441) target = $region44
      $region43: #{vae_forward_pallas.1} parent=11 // pred_region
        _
      $region44: #{vae_forward_pallas.1} parent=11 // pred_fallthru
        _
      // Predicated region
      $region45: #{vae_forward_pallas.1} parent=11 // pred_check
        %p444 = pneg %p264
      $region46: #{vae_forward_pallas.1} parent=11 // pred_check_branch
        %446 = sbr.rel (%p444) target = $region48
      $region47: #{vae_forward_pallas.1} parent=11 // pred_region
        _
      $region48: #{vae_forward_pallas.1} parent=11 // pred_fallthru
        _
      // Predicated region
      $region49: #{vae_forward_pallas.1} parent=11 // pred_check
        %p447 = pneg %p285
      $region50: #{vae_forward_pallas.1} parent=11 // pred_check_branch
        %449 = sbr.rel (%p447) target = $region52
      $region51: #{vae_forward_pallas.1} parent=11 // pred_region
        _
      $region52: #{vae_forward_pallas.1} parent=11 // pred_fallthru
        _
      // Predicated region
      $region53: #{vae_forward_pallas.1} parent=11 // pred_check
        %p450 = pneg %p306
      $region54: #{vae_forward_pallas.1} parent=11 // pred_check_branch
        %452 = sbr.rel (%p450) target = $region56
      $region55: #{vae_forward_pallas.1} parent=11 // pred_region
        _
      $region56: #{vae_forward_pallas.1} parent=11 // pred_fallthru
        _
      // Predicated region
      $region57: #{vae_forward_pallas.1} parent=11 // pred_check
        %p453 = pneg %p327
      $region58: #{vae_forward_pallas.1} parent=11 // pred_check_branch
        %455 = sbr.rel (%p453) target = $region60
      $region59: #{vae_forward_pallas.1} parent=11 // pred_region
        _
      $region60: #{vae_forward_pallas.1} parent=11 // pred_fallthru
        _
    $region12: #{vae_forward_pallas.1} parent=5 // pred_fallthru
      _
    %p456 = scmp.lt.s32.totalorder %s23, 2
    // Predicated region
    $region61: #{vae_forward_pallas.1} parent=5 // pred_check
      %p457 = pneg %p456
    $region62: #{vae_forward_pallas.1} parent=5 // pred_check_branch
      %459 = sbr.rel (%p457) target = $region64
    $region63: #{vae_forward_pallas.1} parent=5 // pred_region
      // Predicated region
      $region65: #{vae_forward_pallas.1} parent=63 // pred_check
        %p460 = pneg %p43
      $region66: #{vae_forward_pallas.1} parent=63 // pred_check_branch
        %462 = sbr.rel (%p460) target = $region68
      $region67: #{vae_forward_pallas.1} parent=63 // pred_region
        %s463 = smul.u32 16, %s23
        %p464 = scmp.lt.s32.totalorder %s463, 31
        %s465 = scalar_select %p464, %s463, 31
        %s466 = smul.addr %s465, 8
        %s467 = scalar_lea.vmem %s0, %s466
        %s468 = smul.u32 16, %s23
      $region68: #{vae_forward_pallas.1} parent=63 // pred_fallthru
        _
      // Predicated region
      $region69: #{vae_forward_pallas.1} parent=63 // pred_check
        %p469 = pneg %p69
      $region70: #{vae_forward_pallas.1} parent=63 // pred_check_branch
        %471 = sbr.rel (%p469) target = $region72
      $region71: #{vae_forward_pallas.1} parent=63 // pred_region
        %s472 = smul.u32 16, %s23
        %p473 = scmp.lt.s32.totalorder %s472, 31
        %s474 = scalar_select %p473, %s472, 31
        %s475 = smul.addr %s474, 8
        %s476 = scalar_lea.vmem %s1, %s475
        %s477 = smul.u32 16, %s23
      $region72: #{vae_forward_pallas.1} parent=63 // pred_fallthru
        _
    $region64: #{vae_forward_pallas.1} parent=5 // pred_fallthru
      _
    %p478 = scmp.le.s32.totalorder 1, %s23
    %p479 = scmp.lt.s32.totalorder %s23, 3
    %p480 = pnand %p478, %p479
    %p481 = pneg %p480
    // Predicated region
    $region73: #{vae_forward_pallas.1} parent=5 // pred_check
      _
    $region74: #{vae_forward_pallas.1} parent=5 // pred_check_branch
      %483 = sbr.rel (%p480) target = $region76
    $region75: #{vae_forward_pallas.1} parent=5 // pred_region
      %s484 = ssub.s32 %s23, 1
      %s485 = smul.u32 16, %s28
      %p486 = scmp.lt.s32.totalorder %s485, 31
      %s487 = scalar_select %p486, %s485, 31
      %s488 = smul.addr %s487, 8
      %s489 = scalar_lea.vmem %s0, %s488
      %p490 = pneg %p49
      %p491 = pneg %p46
      %s492 = smul.u32 16, %s28
      %p493 = scmp.lt.s32.totalorder %s492, 31
      %s494 = scalar_select %p493, %s492, 31
      %s495 = smul.addr %s494, 8
      %s496 = scalar_lea.vmem %s1, %s495
      %p497 = pneg %p75
      %p498 = pneg %p72
      %p499 = pneg %p96
      %p500 = pneg %p93
      %p501 = pneg %p117
      %p502 = pneg %p114
      %p503 = pneg %p138
      %p504 = pneg %p135
      %p505 = pneg %p159
      %p506 = pneg %p156
      %p507 = pneg %p180
      %p508 = pneg %p177
      %p509 = pneg %p201
      %p510 = pneg %p198
      %p511 = pneg %p222
      %p512 = pneg %p219
      %p513 = pneg %p243
      %p514 = pneg %p240
      %p515 = pneg %p264
      %p516 = pneg %p261
      %p517 = pneg %p285
      %p518 = pneg %p282
      %p519 = pneg %p306
      %p520 = pneg %p303
      %p521 = pneg %p327
      %p522 = pneg %p324
      %p523 = pneg %p353
      %p524 = pneg %p350
      %s525 = smul.u32 16, %s28
      %p526 = scmp.lt.s32.totalorder %s525, 31
      %s527 = scalar_select %p526, %s525, 31
      %s528 = smul.addr %s527, 8
      %s529 = scalar_lea.vmem %s14, %s528
      %p530 = pneg %p379
      %p531 = pneg %p376
      %s532 = smul.u32 16, %s28
      %p533 = scmp.lt.s32.totalorder %s532, 31
      %s534 = scalar_select %p533, %s532, 31
      %s535 = smul.addr %s534, 8
      %s536 = scalar_lea.vmem %s15, %s535
      %p537 = pneg %p405
      %p538 = pneg %p402
      %s539 = smul.u32 16, %s28
      %p540 = scmp.lt.s32.totalorder %s539, 31
      %s541 = scalar_select %p540, %s539, 31
      %s542 = smul.addr %s541, 8
      %s543 = scalar_lea.vmem %s16, %s542
      %s544 = smul.u32 16, %s28
      %p545 = scmp.lt.s32.totalorder %s544, 31
      %s546 = scalar_select %p545, %s544, 31
      %s547 = smul.addr %s546, 8
      %s548 = scalar_lea.vmem %s0, %s547
      %s549 = smul.u32 16, %s28
      %s550 = smul.u32 16, %s28
      %p551 = scmp.lt.s32.totalorder %s550, 31
      %s552 = scalar_select %p551, %s550, 31
      %s553 = smul.addr %s552, 8
      %s554 = scalar_lea.vmem %s1, %s553
      %s555 = smul.u32 16, %s28
      %s556 = smul.u32 16, %s28
      %p557 = scmp.lt.s32.totalorder %s556, 31
      %s558 = scalar_select %p557, %s556, 31
      %s559 = smul.addr %s558, 8
      %s560 = scalar_lea.vmem %s14, %s559
      %s561 = smul.u32 16, %s28
      %s562 = smul.u32 16, %s28
      %p563 = scmp.lt.s32.totalorder %s562, 31
      %s564 = scalar_select %p563, %s562, 31
      %s565 = smul.addr %s564, 8
      %s566 = scalar_lea.vmem %s15, %s565
      %s567 = smul.u32 16, %s28
      %s568 = smul.u32 16, %s28
      %p569 = scmp.lt.s32.totalorder %s568, 31
      %s570 = scalar_select %p569, %s568, 31
      %s571 = smul.addr %s570, 8
      %s572 = scalar_lea.vmem %s16, %s571
      %s573 = smul.u32 16, %s28
      %v574 = vld [vmem:[%s548] sm:$0xff]
      %v575 = vld [vmem:[%s548 + $0x8] sm:$0xff]
      %v576 = vld [vmem:[%s548 + $0x10] sm:$0xff]
      %v577 = vld [vmem:[%s548 + $0x18] sm:$0xff]
      %v578 = vld [vmem:[%s548 + $0x20] sm:$0xff]
      %v579 = vld [vmem:[%s548 + $0x28] sm:$0xff]
      %v580 = vld [vmem:[%s548 + $0x30] sm:$0xff]
      %v581 = vld [vmem:[%s548 + $0x38] sm:$0xff]
      %v582 = vld [vmem:[%s548 + $0x40] sm:$0xff]
      %v583 = vld [vmem:[%s548 + $0x48] sm:$0xff]
      %v584 = vld [vmem:[%s548 + $0x50] sm:$0xff]
      %v585 = vld [vmem:[%s548 + $0x58] sm:$0xff]
      %v586 = vld [vmem:[%s548 + $0x60] sm:$0xff]
      %v587 = vld [vmem:[%s548 + $0x68] sm:$0xff]
      %v588 = vld [vmem:[%s548 + $0x70] sm:$0xff]
      %v589 = vld [vmem:[%s548 + $0x78] sm:$0xff]
      %v590 = vld [vmem:[%s2] sm:$0xff]
      %v591 = vld [vmem:[%s2 + $0x8] sm:$0xff]
      %v592 = vld [vmem:[%s2 + $0x10] sm:$0xff]
      %v593 = vld [vmem:[%s2 + $0x18] sm:$0xff]
      %v594 = vld [vmem:[%s2 + $0x20] sm:$0xff]
      %v595 = vld [vmem:[%s2 + $0x28] sm:$0xff]
      %v596 = vld [vmem:[%s2 + $0x30] sm:$0xff]
      %v597 = vld [vmem:[%s2 + $0x38] sm:$0xff]
      %v598 = vld [vmem:[%s2 + $0x40] sm:$0xff]
      %v599 = vld [vmem:[%s2 + $0x48] sm:$0xff]
      %v600 = vld [vmem:[%s2 + $0x50] sm:$0xff]
      %v601 = vld [vmem:[%s2 + $0x58] sm:$0xff]
      %v602 = vld [vmem:[%s2 + $0x60] sm:$0xff]
      %v603 = vld [vmem:[%s2 + $0x68] sm:$0xff]
      %v604 = vld [vmem:[%s2 + $0x70] sm:$0xff]
      %v605 = vld [vmem:[%s2 + $0x78] sm:$0xff]
      %v606 = vld [vmem:[%s3] sm:$0x1]
      %v608 = vlaneseq
      %v609 = vshrl.u32 %v608, 7
      %v610 = vsub.s32 0, %v609
      %v611 = vrot.slane %v606, %v610
      %613 = vmatprep.subr.mxu0 0.0
      %614 = vmatpush1.msra.mxu0 %v605
      %615 = vmatprep.subr.mxu0 0.0
      %616 = vmatpush1.msra.mxu0 %v604
      %617 = vmatprep.subr.mxu0 0.0
      %618 = vmatpush1.msra.mxu0 %v603
      %619 = vmatprep.subr.mxu0 0.0
      %620 = vmatpush1.msra.mxu0 %v602
      %621 = vmatprep.subr.mxu0 0.0
      %622 = vmatpush1.msra.mxu0 %v601
      %623 = vmatprep.subr.mxu0 0.0
      %624 = vmatpush1.msra.mxu0 %v600
      %625 = vmatprep.subr.mxu0 0.0
      %626 = vmatpush1.msra.mxu0 %v599
      %627 = vmatprep.subr.mxu0 0.0
      %628 = vmatpush1.msra.mxu0 %v598
      %629 = vmatprep.subr.mxu0 0.0
      %630 = vmatpush1.msra.mxu0 %v597
      %631 = vmatprep.subr.mxu0 0.0
      %632 = vmatpush1.msra.mxu0 %v596
      %633 = vmatprep.subr.mxu0 0.0
      %634 = vmatpush1.msra.mxu0 %v595
      %635 = vmatprep.subr.mxu0 0.0
      %636 = vmatpush1.msra.mxu0 %v594
      %637 = vmatprep.subr.mxu0 0.0
      %638 = vmatpush1.msra.mxu0 %v593
      %639 = vmatprep.subr.mxu0 0.0
      %640 = vmatpush1.msra.mxu0 %v592
      %641 = vmatprep.subr.mxu0 0.0
      %642 = vmatpush1.msra.mxu0 %v591
      %643 = vmatprep.subr.mxu0 0.0
      %644 = vmatpush1.msra.mxu0 %v590
      %645 = vmatprep.subr.mxu0 0.0
      %646 = vmatpush2.msra.mxu0 0.0
      %647 = vmatprep.subr.mxu0 0.0
      %648 = vmatpush2.msra.mxu0 0.0
      %649 = vmatprep.subr.mxu0 0.0
      %650 = vmatpush2.msra.mxu0 0.0
      %651 = vmatprep.subr.mxu0 0.0
      %652 = vmatpush2.msra.mxu0 0.0
      %653 = vmatprep.subr.mxu0 0.0
      %654 = vmatpush2.msra.mxu0 0.0
      %655 = vmatprep.subr.mxu0 0.0
      %656 = vmatpush2.msra.mxu0 0.0
      %657 = vmatprep.subr.mxu0 0.0
      %658 = vmatpush2.msra.mxu0 0.0
      %659 = vmatprep.subr.mxu0 0.0
      %660 = vmatpush2.msra.mxu0 0.0
      %661 = vmatprep.subr.mxu0 0.0
      %662 = vmatpush2.msra.mxu0 0.0
      %663 = vmatprep.subr.mxu0 0.0
      %664 = vmatpush2.msra.mxu0 0.0
      %665 = vmatprep.subr.mxu0 0.0
      %666 = vmatpush2.msra.mxu0 0.0
      %667 = vmatprep.subr.mxu0 0.0
      %668 = vmatpush2.msra.mxu0 0.0
      %669 = vmatprep.subr.mxu0 0.0
      %670 = vmatpush2.msra.mxu0 0.0
      %671 = vmatprep.subr.mxu0 0.0
      %672 = vmatpush2.msra.mxu0 0.0
      %673 = vmatprep.subr.mxu0 0.0
      %674 = vmatpush2.msra.mxu0 0.0
      %675 = vmatprep.subr.mxu0 0.0
      %676 = vmatpush2.msra.mxu0 0.0
      %677 = vmatprep.mubr.f32.mxu0 0.0
      %678 = vmatmul.mubr.f32.gmra.mxu0 %v574
      %v679 = vpop.f32.mrf.mxu0
      %v680 = vadd.f32 %v611, %v679
      %v681 = vpop.f32.mrf.mxu0
      %682 = vmatprep.mubr.f32.mxu0 0.0
      %683 = vmatmul.mubr.f32.gmra.mxu0 %v575
      %v684 = vpop.f32.mrf.mxu0
      %v685 = vadd.f32 %v611, %v684
      %v686 = vpop.f32.mrf.mxu0
      %687 = vmatprep.mubr.f32.mxu0 0.0
      %688 = vmatmul.mubr.f32.gmra.mxu0 %v576
      %v689 = vpop.f32.mrf.mxu0
      %v690 = vadd.f32 %v611, %v689
      %v691 = vpop.f32.mrf.mxu0
      %692 = vmatprep.mubr.f32.mxu0 0.0
      %693 = vmatmul.mubr.f32.gmra.mxu0 %v577
      %v694 = vpop.f32.mrf.mxu0
      %v695 = vadd.f32 %v611, %v694
      %v696 = vpop.f32.mrf.mxu0
      %697 = vmatprep.mubr.f32.mxu0 0.0
      %698 = vmatmul.mubr.f32.gmra.mxu0 %v578
      %v699 = vpop.f32.mrf.mxu0
      %v700 = vadd.f32 %v611, %v699
      %v701 = vpop.f32.mrf.mxu0
      %702 = vmatprep.mubr.f32.mxu0 0.0
      %703 = vmatmul.mubr.f32.gmra.mxu0 %v579
      %v704 = vpop.f32.mrf.mxu0
      %v705 = vadd.f32 %v611, %v704
      %v706 = vpop.f32.mrf.mxu0
      %707 = vmatprep.mubr.f32.mxu0 0.0
      %708 = vmatmul.mubr.f32.gmra.mxu0 %v580
      %v709 = vpop.f32.mrf.mxu0
      %v710 = vadd.f32 %v611, %v709
      %v711 = vpop.f32.mrf.mxu0
      %712 = vmatprep.mubr.f32.mxu0 0.0
      %713 = vmatmul.mubr.f32.gmra.mxu0 %v581
      %v714 = vpop.f32.mrf.mxu0
      %v715 = vadd.f32 %v611, %v714
      %v716 = vpop.f32.mrf.mxu0
      %717 = vmatprep.mubr.f32.mxu0 0.0
      %718 = vmatmul.mubr.f32.gmra.mxu0 %v582
      %v719 = vpop.f32.mrf.mxu0
      %v720 = vadd.f32 %v611, %v719
      %v721 = vpop.f32.mrf.mxu0
      %722 = vmatprep.mubr.f32.mxu0 0.0
      %723 = vmatmul.mubr.f32.gmra.mxu0 %v583
      %v724 = vpop.f32.mrf.mxu0
      %v725 = vadd.f32 %v611, %v724
      %v726 = vpop.f32.mrf.mxu0
      %727 = vmatprep.mubr.f32.mxu0 0.0
      %728 = vmatmul.mubr.f32.gmra.mxu0 %v584
      %v729 = vpop.f32.mrf.mxu0
      %v730 = vadd.f32 %v611, %v729
      %v731 = vpop.f32.mrf.mxu0
      %732 = vmatprep.mubr.f32.mxu0 0.0
      %733 = vmatmul.mubr.f32.gmra.mxu0 %v585
      %v734 = vpop.f32.mrf.mxu0
      %v735 = vadd.f32 %v611, %v734
      %v736 = vpop.f32.mrf.mxu0
      %737 = vmatprep.mubr.f32.mxu0 0.0
      %738 = vmatmul.mubr.f32.gmra.mxu0 %v586
      %v739 = vpop.f32.mrf.mxu0
      %v740 = vadd.f32 %v611, %v739
      %v741 = vpop.f32.mrf.mxu0
      %742 = vmatprep.mubr.f32.mxu0 0.0
      %743 = vmatmul.mubr.f32.gmra.mxu0 %v587
      %v744 = vpop.f32.mrf.mxu0
      %v745 = vadd.f32 %v611, %v744
      %v746 = vpop.f32.mrf.mxu0
      %747 = vmatprep.mubr.f32.mxu0 0.0
      %748 = vmatmul.mubr.f32.gmra.mxu0 %v588
      %v749 = vpop.f32.mrf.mxu0
      %v750 = vadd.f32 %v611, %v749
      %v751 = vpop.f32.mrf.mxu0
      %752 = vmatprep.mubr.f32.mxu0 0.0
      %753 = vmatmul.mubr.f32.gmra.mxu0 %v589
      %v754 = vpop.f32.mrf.mxu0
      %v755 = vadd.f32 %v611, %v754
      %v756 = vpop.f32.mrf.mxu0
      %757 = vdwg.mxu0
      %v758 = vmax.f32 %v680, 0.0
      %v759 = vmax.f32 %v685, 0.0
      %v760 = vmax.f32 %v690, 0.0
      %v761 = vmax.f32 %v695, 0.0
      %v762 = vmax.f32 %v700, 0.0
      %v763 = vmax.f32 %v705, 0.0
      %v764 = vmax.f32 %v710, 0.0
      %v765 = vmax.f32 %v715, 0.0
      %v766 = vmax.f32 %v720, 0.0
      %v767 = vmax.f32 %v725, 0.0
      %v768 = vmax.f32 %v730, 0.0
      %v769 = vmax.f32 %v735, 0.0
      %v770 = vmax.f32 %v740, 0.0
      %v771 = vmax.f32 %v745, 0.0
      %v772 = vmax.f32 %v750, 0.0
      %v773 = vmax.f32 %v755, 0.0
      %v774 = vld [vmem:[%s4] sm:$0xff]
      %v775 = vld [vmem:[%s4 + $0x8] sm:$0xff]
      %v776 = vld [vmem:[%s4 + $0x10] sm:$0xff]
      %v777 = vld [vmem:[%s4 + $0x18] sm:$0xff]
      %v778 = vld [vmem:[%s4 + $0x20] sm:$0xff]
      %v779 = vld [vmem:[%s4 + $0x28] sm:$0xff]
      %v780 = vld [vmem:[%s4 + $0x30] sm:$0xff]
      %v781 = vld [vmem:[%s4 + $0x38] sm:$0xff]
      %v782 = vld [vmem:[%s4 + $0x40] sm:$0xff]
      %v783 = vld [vmem:[%s4 + $0x48] sm:$0xff]
      %v784 = vld [vmem:[%s4 + $0x50] sm:$0xff]
      %v785 = vld [vmem:[%s4 + $0x58] sm:$0xff]
      %v786 = vld [vmem:[%s4 + $0x60] sm:$0xff]
      %v787 = vld [vmem:[%s4 + $0x68] sm:$0xff]
      %v788 = vld [vmem:[%s4 + $0x70] sm:$0xff]
      %v789 = vld [vmem:[%s4 + $0x78] sm:$0xff]
      %v790 = vld [vmem:[%s5] sm:$0x1]
      %v792 = vlaneseq
      %v793 = vshrl.u32 %v792, 7
      %v794 = vsub.s32 0, %v793
      %v795 = vrot.slane %v790, %v794
      %797 = vmatprep.subr.mxu0 0.0
      %798 = vmatpush1.msra.mxu0 %v789
      %799 = vmatprep.subr.mxu0 0.0
      %800 = vmatpush1.msra.mxu0 %v788
      %801 = vmatprep.subr.mxu0 0.0
      %802 = vmatpush1.msra.mxu0 %v787
      %803 = vmatprep.subr.mxu0 0.0
      %804 = vmatpush1.msra.mxu0 %v786
      %805 = vmatprep.subr.mxu0 0.0
      %806 = vmatpush1.msra.mxu0 %v785
      %807 = vmatprep.subr.mxu0 0.0
      %808 = vmatpush1.msra.mxu0 %v784
      %809 = vmatprep.subr.mxu0 0.0
      %810 = vmatpush1.msra.mxu0 %v783
      %811 = vmatprep.subr.mxu0 0.0
      %812 = vmatpush1.msra.mxu0 %v782
      %813 = vmatprep.subr.mxu0 0.0
      %814 = vmatpush1.msra.mxu0 %v781
      %815 = vmatprep.subr.mxu0 0.0
      %816 = vmatpush1.msra.mxu0 %v780
      %817 = vmatprep.subr.mxu0 0.0
      %818 = vmatpush1.msra.mxu0 %v779
      %819 = vmatprep.subr.mxu0 0.0
      %820 = vmatpush1.msra.mxu0 %v778
      %821 = vmatprep.subr.mxu0 0.0
      %822 = vmatpush1.msra.mxu0 %v777
      %823 = vmatprep.subr.mxu0 0.0
      %824 = vmatpush1.msra.mxu0 %v776
      %825 = vmatprep.subr.mxu0 0.0
      %826 = vmatpush1.msra.mxu0 %v775
      %827 = vmatprep.subr.mxu0 0.0
      %828 = vmatpush1.msra.mxu0 %v774
      %829 = vmatprep.subr.mxu0 0.0
      %830 = vmatpush2.msra.mxu0 0.0
      %831 = vmatprep.subr.mxu0 0.0
      %832 = vmatpush2.msra.mxu0 0.0
      %833 = vmatprep.subr.mxu0 0.0
      %834 = vmatpush2.msra.mxu0 0.0
      %835 = vmatprep.subr.mxu0 0.0
      %836 = vmatpush2.msra.mxu0 0.0
      %837 = vmatprep.subr.mxu0 0.0
      %838 = vmatpush2.msra.mxu0 0.0
      %839 = vmatprep.subr.mxu0 0.0
      %840 = vmatpush2.msra.mxu0 0.0
      %841 = vmatprep.subr.mxu0 0.0
      %842 = vmatpush2.msra.mxu0 0.0
      %843 = vmatprep.subr.mxu0 0.0
      %844 = vmatpush2.msra.mxu0 0.0
      %845 = vmatprep.subr.mxu0 0.0
      %846 = vmatpush2.msra.mxu0 0.0
      %847 = vmatprep.subr.mxu0 0.0
      %848 = vmatpush2.msra.mxu0 0.0
      %849 = vmatprep.subr.mxu0 0.0
      %850 = vmatpush2.msra.mxu0 0.0
      %851 = vmatprep.subr.mxu0 0.0
      %852 = vmatpush2.msra.mxu0 0.0
      %853 = vmatprep.subr.mxu0 0.0
      %854 = vmatpush2.msra.mxu0 0.0
      %855 = vmatprep.subr.mxu0 0.0
      %856 = vmatpush2.msra.mxu0 0.0
      %857 = vmatprep.subr.mxu0 0.0
      %858 = vmatpush2.msra.mxu0 0.0
      %859 = vmatprep.subr.mxu0 0.0
      %860 = vmatpush2.msra.mxu0 0.0
      %861 = vmatprep.mubr.f32.mxu0 0.0
      %862 = vmatmul.mubr.f32.gmra.mxu0 %v758
      %v863 = vpop.f32.mrf.mxu0
      %v864 = vadd.f32 %v795, %v863
      %v865 = vpop.f32.mrf.mxu0
      %866 = vmatprep.mubr.f32.mxu0 0.0
      %867 = vmatmul.mubr.f32.gmra.mxu0 %v759
      %v868 = vpop.f32.mrf.mxu0
      %v869 = vadd.f32 %v795, %v868
      %v870 = vpop.f32.mrf.mxu0
      %871 = vmatprep.mubr.f32.mxu0 0.0
      %872 = vmatmul.mubr.f32.gmra.mxu0 %v760
      %v873 = vpop.f32.mrf.mxu0
      %v874 = vadd.f32 %v795, %v873
      %v875 = vpop.f32.mrf.mxu0
      %876 = vmatprep.mubr.f32.mxu0 0.0
      %877 = vmatmul.mubr.f32.gmra.mxu0 %v761
      %v878 = vpop.f32.mrf.mxu0
      %v879 = vadd.f32 %v795, %v878
      %v880 = vpop.f32.mrf.mxu0
      %881 = vmatprep.mubr.f32.mxu0 0.0
      %882 = vmatmul.mubr.f32.gmra.mxu0 %v762
      %v883 = vpop.f32.mrf.mxu0
      %v884 = vadd.f32 %v795, %v883
      %v885 = vpop.f32.mrf.mxu0
      %886 = vmatprep.mubr.f32.mxu0 0.0
      %887 = vmatmul.mubr.f32.gmra.mxu0 %v763
      %v888 = vpop.f32.mrf.mxu0
      %v889 = vadd.f32 %v795, %v888
      %v890 = vpop.f32.mrf.mxu0
      %891 = vmatprep.mubr.f32.mxu0 0.0
      %892 = vmatmul.mubr.f32.gmra.mxu0 %v764
      %v893 = vpop.f32.mrf.mxu0
      %v894 = vadd.f32 %v795, %v893
      %v895 = vpop.f32.mrf.mxu0
      %896 = vmatprep.mubr.f32.mxu0 0.0
      %897 = vmatmul.mubr.f32.gmra.mxu0 %v765
      %v898 = vpop.f32.mrf.mxu0
      %v899 = vadd.f32 %v795, %v898
      %v900 = vpop.f32.mrf.mxu0
      %901 = vmatprep.mubr.f32.mxu0 0.0
      %902 = vmatmul.mubr.f32.gmra.mxu0 %v766
      %v903 = vpop.f32.mrf.mxu0
      %v904 = vadd.f32 %v795, %v903
      %v905 = vpop.f32.mrf.mxu0
      %906 = vmatprep.mubr.f32.mxu0 0.0
      %907 = vmatmul.mubr.f32.gmra.mxu0 %v767
      %v908 = vpop.f32.mrf.mxu0
      %v909 = vadd.f32 %v795, %v908
      %v910 = vpop.f32.mrf.mxu0
      %911 = vmatprep.mubr.f32.mxu0 0.0
      %912 = vmatmul.mubr.f32.gmra.mxu0 %v768
      %v913 = vpop.f32.mrf.mxu0
      %v914 = vadd.f32 %v795, %v913
      %v915 = vpop.f32.mrf.mxu0
      %916 = vmatprep.mubr.f32.mxu0 0.0
      %917 = vmatmul.mubr.f32.gmra.mxu0 %v769
      %v918 = vpop.f32.mrf.mxu0
      %v919 = vadd.f32 %v795, %v918
      %v920 = vpop.f32.mrf.mxu0
      %921 = vmatprep.mubr.f32.mxu0 0.0
      %922 = vmatmul.mubr.f32.gmra.mxu0 %v770
      %v923 = vpop.f32.mrf.mxu0
      %v924 = vadd.f32 %v795, %v923
      %v925 = vpop.f32.mrf.mxu0
      %926 = vmatprep.mubr.f32.mxu0 0.0
      %927 = vmatmul.mubr.f32.gmra.mxu0 %v771
      %v928 = vpop.f32.mrf.mxu0
      %v929 = vadd.f32 %v795, %v928
      %v930 = vpop.f32.mrf.mxu0
      %931 = vmatprep.mubr.f32.mxu0 0.0
      %932 = vmatmul.mubr.f32.gmra.mxu0 %v772
      %v933 = vpop.f32.mrf.mxu0
      %v934 = vadd.f32 %v795, %v933
      %v935 = vpop.f32.mrf.mxu0
      %936 = vmatprep.mubr.f32.mxu0 0.0
      %937 = vmatmul.mubr.f32.gmra.mxu0 %v773
      %v938 = vpop.f32.mrf.mxu0
      %v939 = vadd.f32 %v795, %v938
      %v940 = vpop.f32.mrf.mxu0
      %941 = vdwg.mxu0
      %v942 = vmax.f32 %v864, 0.0
      %v943 = vmax.f32 %v869, 0.0
      %v944 = vmax.f32 %v874, 0.0
      %v945 = vmax.f32 %v879, 0.0
      %v946 = vmax.f32 %v884, 0.0
      %v947 = vmax.f32 %v889, 0.0
      %v948 = vmax.f32 %v894, 0.0
      %v949 = vmax.f32 %v899, 0.0
      %v950 = vmax.f32 %v904, 0.0
      %v951 = vmax.f32 %v909, 0.0
      %v952 = vmax.f32 %v914, 0.0
      %v953 = vmax.f32 %v919, 0.0
      %v954 = vmax.f32 %v924, 0.0
      %v955 = vmax.f32 %v929, 0.0
      %v956 = vmax.f32 %v934, 0.0
      %v957 = vmax.f32 %v939, 0.0
      %v958 = vld [vmem:[%s6] sm:$0xff]
      %v959 = vld [vmem:[%s6 + $0x8] sm:$0xff]
      %v960 = vld [vmem:[%s6 + $0x10] sm:$0xff]
      %v961 = vld [vmem:[%s6 + $0x18] sm:$0xff]
      %v962 = vld [vmem:[%s6 + $0x20] sm:$0xff]
      %v963 = vld [vmem:[%s6 + $0x28] sm:$0xff]
      %v964 = vld [vmem:[%s6 + $0x30] sm:$0xff]
      %v965 = vld [vmem:[%s6 + $0x38] sm:$0xff]
      %v966 = vld [vmem:[%s6 + $0x40] sm:$0xff]
      %v967 = vld [vmem:[%s6 + $0x48] sm:$0xff]
      %v968 = vld [vmem:[%s6 + $0x50] sm:$0xff]
      %v969 = vld [vmem:[%s6 + $0x58] sm:$0xff]
      %v970 = vld [vmem:[%s6 + $0x60] sm:$0xff]
      %v971 = vld [vmem:[%s6 + $0x68] sm:$0xff]
      %v972 = vld [vmem:[%s6 + $0x70] sm:$0xff]
      %v973 = vld [vmem:[%s6 + $0x78] sm:$0xff]
      %v974 = vld [vmem:[%s6 + $0x80] sm:$0xff]
      %v975 = vld [vmem:[%s6 + $0x88] sm:$0xff]
      %v976 = vld [vmem:[%s6 + $0x90] sm:$0xff]
      %v977 = vld [vmem:[%s6 + $0x98] sm:$0xff]
      %v978 = vld [vmem:[%s6 + $0xa0] sm:$0xff]
      %v979 = vld [vmem:[%s6 + $0xa8] sm:$0xff]
      %v980 = vld [vmem:[%s6 + $0xb0] sm:$0xff]
      %v981 = vld [vmem:[%s6 + $0xb8] sm:$0xff]
      %v982 = vld [vmem:[%s6 + $0xc0] sm:$0xff]
      %v983 = vld [vmem:[%s6 + $0xc8] sm:$0xff]
      %v984 = vld [vmem:[%s6 + $0xd0] sm:$0xff]
      %v985 = vld [vmem:[%s6 + $0xd8] sm:$0xff]
      %v986 = vld [vmem:[%s6 + $0xe0] sm:$0xff]
      %v987 = vld [vmem:[%s6 + $0xe8] sm:$0xff]
      %v988 = vld [vmem:[%s6 + $0xf0] sm:$0xff]
      %v989 = vld [vmem:[%s6 + $0xf8] sm:$0xff]
      %v990 = vld [vmem:[%s7] sm:$0x3]
      %v992 = vlaneseq
      %v993 = vshrl.u32 %v992, 7
      %v994 = vsub.s32 0, %v993
      %v995 = vrot.slane %v990, %v994
      %v996 = vlaneseq
      %v997 = vshrl.u32 %v996, 7
      %v998 = vsub.s32 1, %v997
      %v999 = vrot.slane %v990, %v998
      %1002 = vmatprep.subr.mxu0 %v989
      %1003 = vmatpush1.msra.mxu0 %v988
      %1004 = vmatprep.subr.mxu0 %v987
      %1005 = vmatpush1.msra.mxu0 %v986
      %1006 = vmatprep.subr.mxu0 %v985
      %1007 = vmatpush1.msra.mxu0 %v984
      %1008 = vmatprep.subr.mxu0 %v983
      %1009 = vmatpush1.msra.mxu0 %v982
      %1010 = vmatprep.subr.mxu0 %v981
      %1011 = vmatpush1.msra.mxu0 %v980
      %1012 = vmatprep.subr.mxu0 %v979
      %1013 = vmatpush1.msra.mxu0 %v978
      %1014 = vmatprep.subr.mxu0 %v977
      %1015 = vmatpush1.msra.mxu0 %v976
      %1016 = vmatprep.subr.mxu0 %v975
      %1017 = vmatpush1.msra.mxu0 %v974
      %1018 = vmatprep.subr.mxu0 %v973
      %1019 = vmatpush1.msra.mxu0 %v972
      %1020 = vmatprep.subr.mxu0 %v971
      %1021 = vmatpush1.msra.mxu0 %v970
      %1022 = vmatprep.subr.mxu0 %v969
      %1023 = vmatpush1.msra.mxu0 %v968
      %1024 = vmatprep.subr.mxu0 %v967
      %1025 = vmatpush1.msra.mxu0 %v966
      %1026 = vmatprep.subr.mxu0 %v965
      %1027 = vmatpush1.msra.mxu0 %v964
      %1028 = vmatprep.subr.mxu0 %v963
      %1029 = vmatpush1.msra.mxu0 %v962
      %1030 = vmatprep.subr.mxu0 %v961
      %1031 = vmatpush1.msra.mxu0 %v960
      %1032 = vmatprep.subr.mxu0 %v959
      %1033 = vmatpush1.msra.mxu0 %v958
      %1034 = vmatprep.subr.mxu0 0.0
      %1035 = vmatpush2.msra.mxu0 0.0
      %1036 = vmatprep.subr.mxu0 0.0
      %1037 = vmatpush2.msra.mxu0 0.0
      %1038 = vmatprep.subr.mxu0 0.0
      %1039 = vmatpush2.msra.mxu0 0.0
      %1040 = vmatprep.subr.mxu0 0.0
      %1041 = vmatpush2.msra.mxu0 0.0
      %1042 = vmatprep.subr.mxu0 0.0
      %1043 = vmatpush2.msra.mxu0 0.0
      %1044 = vmatprep.subr.mxu0 0.0
      %1045 = vmatpush2.msra.mxu0 0.0
      %1046 = vmatprep.subr.mxu0 0.0
      %1047 = vmatpush2.msra.mxu0 0.0
      %1048 = vmatprep.subr.mxu0 0.0
      %1049 = vmatpush2.msra.mxu0 0.0
      %1050 = vmatprep.subr.mxu0 0.0
      %1051 = vmatpush2.msra.mxu0 0.0
      %1052 = vmatprep.subr.mxu0 0.0
      %1053 = vmatpush2.msra.mxu0 0.0
      %1054 = vmatprep.subr.mxu0 0.0
      %1055 = vmatpush2.msra.mxu0 0.0
      %1056 = vmatprep.subr.mxu0 0.0
      %1057 = vmatpush2.msra.mxu0 0.0
      %1058 = vmatprep.subr.mxu0 0.0
      %1059 = vmatpush2.msra.mxu0 0.0
      %1060 = vmatprep.subr.mxu0 0.0
      %1061 = vmatpush2.msra.mxu0 0.0
      %1062 = vmatprep.subr.mxu0 0.0
      %1063 = vmatpush2.msra.mxu0 0.0
      %1064 = vmatprep.subr.mxu0 0.0
      %1065 = vmatpush2.msra.mxu0 0.0
      %1066 = vmatprep.mubr.f32.mxu0 0.0
      %1067 = vmatmul.mubr.f32.gmra.mxu0 %v942
      %v1068 = vpop.f32.mrf.mxu0
      %v1069 = vadd.f32 %v995, %v1068
      %v1070 = vpop.f32.mrf.mxu0
      %v1071 = vadd.f32 %v999, %v1070
      %1072 = vmatprep.mubr.f32.mxu0 0.0
      %1073 = vmatmul.mubr.f32.gmra.mxu0 %v943
      %v1074 = vpop.f32.mrf.mxu0
      %v1075 = vadd.f32 %v995, %v1074
      %v1076 = vpop.f32.mrf.mxu0
      %v1077 = vadd.f32 %v999, %v1076
      %1078 = vmatprep.mubr.f32.mxu0 0.0
      %1079 = vmatmul.mubr.f32.gmra.mxu0 %v944
      %v1080 = vpop.f32.mrf.mxu0
      %v1081 = vadd.f32 %v995, %v1080
      %v1082 = vpop.f32.mrf.mxu0
      %v1083 = vadd.f32 %v999, %v1082
      %1084 = vmatprep.mubr.f32.mxu0 0.0
      %1085 = vmatmul.mubr.f32.gmra.mxu0 %v945
      %v1086 = vpop.f32.mrf.mxu0
      %v1087 = vadd.f32 %v995, %v1086
      %v1088 = vpop.f32.mrf.mxu0
      %v1089 = vadd.f32 %v999, %v1088
      %1090 = vmatprep.mubr.f32.mxu0 0.0
      %1091 = vmatmul.mubr.f32.gmra.mxu0 %v946
      %v1092 = vpop.f32.mrf.mxu0
      %v1093 = vadd.f32 %v995, %v1092
      %v1094 = vpop.f32.mrf.mxu0
      %v1095 = vadd.f32 %v999, %v1094
      %1096 = vmatprep.mubr.f32.mxu0 0.0
      %1097 = vmatmul.mubr.f32.gmra.mxu0 %v947
      %v1098 = vpop.f32.mrf.mxu0
      %v1099 = vadd.f32 %v995, %v1098
      %v1100 = vpop.f32.mrf.mxu0
      %v1101 = vadd.f32 %v999, %v1100
      %1102 = vmatprep.mubr.f32.mxu0 0.0
      %1103 = vmatmul.mubr.f32.gmra.mxu0 %v948
      %v1104 = vpop.f32.mrf.mxu0
      %v1105 = vadd.f32 %v995, %v1104
      %v1106 = vpop.f32.mrf.mxu0
      %v1107 = vadd.f32 %v999, %v1106
      %1108 = vmatprep.mubr.f32.mxu0 0.0
      %1109 = vmatmul.mubr.f32.gmra.mxu0 %v949
      %v1110 = vpop.f32.mrf.mxu0
      %v1111 = vadd.f32 %v995, %v1110
      %v1112 = vpop.f32.mrf.mxu0
      %v1113 = vadd.f32 %v999, %v1112
      %1114 = vmatprep.mubr.f32.mxu0 0.0
      %1115 = vmatmul.mubr.f32.gmra.mxu0 %v950
      %v1116 = vpop.f32.mrf.mxu0
      %v1117 = vadd.f32 %v995, %v1116
      %v1118 = vpop.f32.mrf.mxu0
      %v1119 = vadd.f32 %v999, %v1118
      %1120 = vmatprep.mubr.f32.mxu0 0.0
      %1121 = vmatmul.mubr.f32.gmra.mxu0 %v951
      %v1122 = vpop.f32.mrf.mxu0
      %v1123 = vadd.f32 %v995, %v1122
      %v1124 = vpop.f32.mrf.mxu0
      %v1125 = vadd.f32 %v999, %v1124
      %1126 = vmatprep.mubr.f32.mxu0 0.0
      %1127 = vmatmul.mubr.f32.gmra.mxu0 %v952
      %v1128 = vpop.f32.mrf.mxu0
      %v1129 = vadd.f32 %v995, %v1128
      %v1130 = vpop.f32.mrf.mxu0
      %v1131 = vadd.f32 %v999, %v1130
      %1132 = vmatprep.mubr.f32.mxu0 0.0
      %1133 = vmatmul.mubr.f32.gmra.mxu0 %v953
      %v1134 = vpop.f32.mrf.mxu0
      %v1135 = vadd.f32 %v995, %v1134
      %v1136 = vpop.f32.mrf.mxu0
      %v1137 = vadd.f32 %v999, %v1136
      %1138 = vmatprep.mubr.f32.mxu0 0.0
      %1139 = vmatmul.mubr.f32.gmra.mxu0 %v954
      %v1140 = vpop.f32.mrf.mxu0
      %v1141 = vadd.f32 %v995, %v1140
      %v1142 = vpop.f32.mrf.mxu0
      %v1143 = vadd.f32 %v999, %v1142
      %1144 = vmatprep.mubr.f32.mxu0 0.0
      %1145 = vmatmul.mubr.f32.gmra.mxu0 %v955
      %v1146 = vpop.f32.mrf.mxu0
      %v1147 = vadd.f32 %v995, %v1146
      %v1148 = vpop.f32.mrf.mxu0
      %v1149 = vadd.f32 %v999, %v1148
      %1150 = vmatprep.mubr.f32.mxu0 0.0
      %1151 = vmatmul.mubr.f32.gmra.mxu0 %v956
      %v1152 = vpop.f32.mrf.mxu0
      %v1153 = vadd.f32 %v995, %v1152
      %v1154 = vpop.f32.mrf.mxu0
      %v1155 = vadd.f32 %v999, %v1154
      %1156 = vmatprep.mubr.f32.mxu0 0.0
      %1157 = vmatmul.mubr.f32.gmra.mxu0 %v957
      %v1158 = vpop.f32.mrf.mxu0
      %v1159 = vadd.f32 %v995, %v1158
      %v1160 = vpop.f32.mrf.mxu0
      %v1161 = vadd.f32 %v999, %v1160
      %1162 = vdwg.mxu0
      %v1163 = vld [vmem:[%s554] sm:$0xff]
      %v1164 = vld [vmem:[%s554 + $0x8] sm:$0xff]
      %v1165 = vld [vmem:[%s554 + $0x10] sm:$0xff]
      %v1166 = vld [vmem:[%s554 + $0x18] sm:$0xff]
      %v1167 = vld [vmem:[%s554 + $0x20] sm:$0xff]
      %v1168 = vld [vmem:[%s554 + $0x28] sm:$0xff]
      %v1169 = vld [vmem:[%s554 + $0x30] sm:$0xff]
      %v1170 = vld [vmem:[%s554 + $0x38] sm:$0xff]
      %v1171 = vld [vmem:[%s554 + $0x40] sm:$0xff]
      %v1172 = vld [vmem:[%s554 + $0x48] sm:$0xff]
      %v1173 = vld [vmem:[%s554 + $0x50] sm:$0xff]
      %v1174 = vld [vmem:[%s554 + $0x58] sm:$0xff]
      %v1175 = vld [vmem:[%s554 + $0x60] sm:$0xff]
      %v1176 = vld [vmem:[%s554 + $0x68] sm:$0xff]
      %v1177 = vld [vmem:[%s554 + $0x70] sm:$0xff]
      %v1178 = vld [vmem:[%s554 + $0x78] sm:$0xff]
      %v1179 = vmul.f32 %v1071, 0.5
      %v1180 = vmul.f32 %v1077, 0.5
      %v1181 = vmul.f32 %v1083, 0.5
      %v1182 = vmul.f32 %v1089, 0.5
      %v1183 = vmul.f32 %v1095, 0.5
      %v1184 = vmul.f32 %v1101, 0.5
      %v1185 = vmul.f32 %v1107, 0.5
      %v1186 = vmul.f32 %v1113, 0.5
      %v1187 = vmul.f32 %v1119, 0.5
      %v1188 = vmul.f32 %v1125, 0.5
      %v1189 = vmul.f32 %v1131, 0.5
      %v1190 = vmul.f32 %v1137, 0.5
      %v1191 = vmul.f32 %v1143, 0.5
      %v1192 = vmul.f32 %v1149, 0.5
      %v1193 = vmul.f32 %v1155, 0.5
      %v1194 = vmul.f32 %v1161, 0.5
      %v1195 = vmul.f32 %v1179, 1.442695
      %v1196 = vpow.pop %v1195
      %v1197 = vmul.f32 %v1180, 1.442695
      %v1198 = vpow.pop %v1197
      %v1199 = vmul.f32 %v1181, 1.442695
      %v1200 = vpow.pop %v1199
      %v1201 = vmul.f32 %v1182, 1.442695
      %v1202 = vpow.pop %v1201
      %v1203 = vmul.f32 %v1183, 1.442695
      %v1204 = vpow.pop %v1203
      %v1205 = vmul.f32 %v1184, 1.442695
      %v1206 = vpow.pop %v1205
      %v1207 = vmul.f32 %v1185, 1.442695
      %v1208 = vpow.pop %v1207
      %v1209 = vmul.f32 %v1186, 1.442695
      %v1210 = vpow.pop %v1209
      %v1211 = vmul.f32 %v1187, 1.442695
      %v1212 = vpow.pop %v1211
      %v1213 = vmul.f32 %v1188, 1.442695
      %v1214 = vpow.pop %v1213
      %v1215 = vmul.f32 %v1189, 1.442695
      %v1216 = vpow.pop %v1215
      %v1217 = vmul.f32 %v1190, 1.442695
      %v1218 = vpow.pop %v1217
      %v1219 = vmul.f32 %v1191, 1.442695
      %v1220 = vpow.pop %v1219
      %v1221 = vmul.f32 %v1192, 1.442695
      %v1222 = vpow.pop %v1221
      %v1223 = vmul.f32 %v1193, 1.442695
      %v1224 = vpow.pop %v1223
      %v1225 = vmul.f32 %v1194, 1.442695
      %v1226 = vpow.pop %v1225
      %v1227 = vmul.f32 %v1196, %v1163
      %v1228 = vmul.f32 %v1198, %v1164
      %v1229 = vmul.f32 %v1200, %v1165
      %v1230 = vmul.f32 %v1202, %v1166
      %v1231 = vmul.f32 %v1204, %v1167
      %v1232 = vmul.f32 %v1206, %v1168
      %v1233 = vmul.f32 %v1208, %v1169
      %v1234 = vmul.f32 %v1210, %v1170
      %v1235 = vmul.f32 %v1212, %v1171
      %v1236 = vmul.f32 %v1214, %v1172
      %v1237 = vmul.f32 %v1216, %v1173
      %v1238 = vmul.f32 %v1218, %v1174
      %v1239 = vmul.f32 %v1220, %v1175
      %v1240 = vmul.f32 %v1222, %v1176
      %v1241 = vmul.f32 %v1224, %v1177
      %v1242 = vmul.f32 %v1226, %v1178
      %v1243 = vadd.f32 %v1227, %v1069
      %v1244 = vadd.f32 %v1228, %v1075
      %v1245 = vadd.f32 %v1229, %v1081
      %v1246 = vadd.f32 %v1230, %v1087
      %v1247 = vadd.f32 %v1231, %v1093
      %v1248 = vadd.f32 %v1232, %v1099
      %v1249 = vadd.f32 %v1233, %v1105
      %v1250 = vadd.f32 %v1234, %v1111
      %v1251 = vadd.f32 %v1235, %v1117
      %v1252 = vadd.f32 %v1236, %v1123
      %v1253 = vadd.f32 %v1237, %v1129
      %v1254 = vadd.f32 %v1238, %v1135
      %v1255 = vadd.f32 %v1239, %v1141
      %v1256 = vadd.f32 %v1240, %v1147
      %v1257 = vadd.f32 %v1241, %v1153
      %v1258 = vadd.f32 %v1242, %v1159
      %v1259 = vld [vmem:[%s8] sm:$0xff]
      %v1260 = vld [vmem:[%s8 + $0x8] sm:$0xff]
      %v1261 = vld [vmem:[%s8 + $0x10] sm:$0xff]
      %v1262 = vld [vmem:[%s8 + $0x18] sm:$0xff]
      %v1263 = vld [vmem:[%s8 + $0x20] sm:$0xff]
      %v1264 = vld [vmem:[%s8 + $0x28] sm:$0xff]
      %v1265 = vld [vmem:[%s8 + $0x30] sm:$0xff]
      %v1266 = vld [vmem:[%s8 + $0x38] sm:$0xff]
      %v1267 = vld [vmem:[%s8 + $0x40] sm:$0xff]
      %v1268 = vld [vmem:[%s8 + $0x48] sm:$0xff]
      %v1269 = vld [vmem:[%s8 + $0x50] sm:$0xff]
      %v1270 = vld [vmem:[%s8 + $0x58] sm:$0xff]
      %v1271 = vld [vmem:[%s8 + $0x60] sm:$0xff]
      %v1272 = vld [vmem:[%s8 + $0x68] sm:$0xff]
      %v1273 = vld [vmem:[%s8 + $0x70] sm:$0xff]
      %v1274 = vld [vmem:[%s8 + $0x78] sm:$0xff]
      %v1275 = vld [vmem:[%s9] sm:$0x1]
      %v1277 = vlaneseq
      %v1278 = vshrl.u32 %v1277, 7
      %v1279 = vsub.s32 0, %v1278
      %v1280 = vrot.slane %v1275, %v1279
      %1282 = vmatprep.subr.mxu0 0.0
      %1283 = vmatpush1.msra.mxu0 %v1274
      %1284 = vmatprep.subr.mxu0 0.0
      %1285 = vmatpush1.msra.mxu0 %v1273
      %1286 = vmatprep.subr.mxu0 0.0
      %1287 = vmatpush1.msra.mxu0 %v1272
      %1288 = vmatprep.subr.mxu0 0.0
      %1289 = vmatpush1.msra.mxu0 %v1271
      %1290 = vmatprep.subr.mxu0 0.0
      %1291 = vmatpush1.msra.mxu0 %v1270
      %1292 = vmatprep.subr.mxu0 0.0
      %1293 = vmatpush1.msra.mxu0 %v1269
      %1294 = vmatprep.subr.mxu0 0.0
      %1295 = vmatpush1.msra.mxu0 %v1268
      %1296 = vmatprep.subr.mxu0 0.0
      %1297 = vmatpush1.msra.mxu0 %v1267
      %1298 = vmatprep.subr.mxu0 0.0
      %1299 = vmatpush1.msra.mxu0 %v1266
      %1300 = vmatprep.subr.mxu0 0.0
      %1301 = vmatpush1.msra.mxu0 %v1265
      %1302 = vmatprep.subr.mxu0 0.0
      %1303 = vmatpush1.msra.mxu0 %v1264
      %1304 = vmatprep.subr.mxu0 0.0
      %1305 = vmatpush1.msra.mxu0 %v1263
      %1306 = vmatprep.subr.mxu0 0.0
      %1307 = vmatpush1.msra.mxu0 %v1262
      %1308 = vmatprep.subr.mxu0 0.0
      %1309 = vmatpush1.msra.mxu0 %v1261
      %1310 = vmatprep.subr.mxu0 0.0
      %1311 = vmatpush1.msra.mxu0 %v1260
      %1312 = vmatprep.subr.mxu0 0.0
      %1313 = vmatpush1.msra.mxu0 %v1259
      %1314 = vmatprep.subr.mxu0 0.0
      %1315 = vmatpush2.msra.mxu0 0.0
      %1316 = vmatprep.subr.mxu0 0.0
      %1317 = vmatpush2.msra.mxu0 0.0
      %1318 = vmatprep.subr.mxu0 0.0
      %1319 = vmatpush2.msra.mxu0 0.0
      %1320 = vmatprep.subr.mxu0 0.0
      %1321 = vmatpush2.msra.mxu0 0.0
      %1322 = vmatprep.subr.mxu0 0.0
      %1323 = vmatpush2.msra.mxu0 0.0
      %1324 = vmatprep.subr.mxu0 0.0
      %1325 = vmatpush2.msra.mxu0 0.0
      %1326 = vmatprep.subr.mxu0 0.0
      %1327 = vmatpush2.msra.mxu0 0.0
      %1328 = vmatprep.subr.mxu0 0.0
      %1329 = vmatpush2.msra.mxu0 0.0
      %1330 = vmatprep.subr.mxu0 0.0
      %1331 = vmatpush2.msra.mxu0 0.0
      %1332 = vmatprep.subr.mxu0 0.0
      %1333 = vmatpush2.msra.mxu0 0.0
      %1334 = vmatprep.subr.mxu0 0.0
      %1335 = vmatpush2.msra.mxu0 0.0
      %1336 = vmatprep.subr.mxu0 0.0
      %1337 = vmatpush2.msra.mxu0 0.0
      %1338 = vmatprep.subr.mxu0 0.0
      %1339 = vmatpush2.msra.mxu0 0.0
      %1340 = vmatprep.subr.mxu0 0.0
      %1341 = vmatpush2.msra.mxu0 0.0
      %1342 = vmatprep.subr.mxu0 0.0
      %1343 = vmatpush2.msra.mxu0 0.0
      %1344 = vmatprep.subr.mxu0 0.0
      %1345 = vmatpush2.msra.mxu0 0.0
      %1346 = vmatprep.mubr.f32.mxu0 0.0
      %1347 = vmatmul.mubr.f32.gmra.mxu0 %v1243
      %v1348 = vpop.f32.mrf.mxu0
      %v1349 = vadd.f32 %v1280, %v1348
      %v1350 = vpop.f32.mrf.mxu0
      %1351 = vmatprep.mubr.f32.mxu0 0.0
      %1352 = vmatmul.mubr.f32.gmra.mxu0 %v1244
      %v1353 = vpop.f32.mrf.mxu0
      %v1354 = vadd.f32 %v1280, %v1353
      %v1355 = vpop.f32.mrf.mxu0
      %1356 = vmatprep.mubr.f32.mxu0 0.0
      %1357 = vmatmul.mubr.f32.gmra.mxu0 %v1245
      %v1358 = vpop.f32.mrf.mxu0
      %v1359 = vadd.f32 %v1280, %v1358
      %v1360 = vpop.f32.mrf.mxu0
      %1361 = vmatprep.mubr.f32.mxu0 0.0
      %1362 = vmatmul.mubr.f32.gmra.mxu0 %v1246
      %v1363 = vpop.f32.mrf.mxu0
      %v1364 = vadd.f32 %v1280, %v1363
      %v1365 = vpop.f32.mrf.mxu0
      %1366 = vmatprep.mubr.f32.mxu0 0.0
      %1367 = vmatmul.mubr.f32.gmra.mxu0 %v1247
      %v1368 = vpop.f32.mrf.mxu0
      %v1369 = vadd.f32 %v1280, %v1368
      %v1370 = vpop.f32.mrf.mxu0
      %1371 = vmatprep.mubr.f32.mxu0 0.0
      %1372 = vmatmul.mubr.f32.gmra.mxu0 %v1248
      %v1373 = vpop.f32.mrf.mxu0
      %v1374 = vadd.f32 %v1280, %v1373
      %v1375 = vpop.f32.mrf.mxu0
      %1376 = vmatprep.mubr.f32.mxu0 0.0
      %1377 = vmatmul.mubr.f32.gmra.mxu0 %v1249
      %v1378 = vpop.f32.mrf.mxu0
      %v1379 = vadd.f32 %v1280, %v1378
      %v1380 = vpop.f32.mrf.mxu0
      %1381 = vmatprep.mubr.f32.mxu0 0.0
      %1382 = vmatmul.mubr.f32.gmra.mxu0 %v1250
      %v1383 = vpop.f32.mrf.mxu0
      %v1384 = vadd.f32 %v1280, %v1383
      %v1385 = vpop.f32.mrf.mxu0
      %1386 = vmatprep.mubr.f32.mxu0 0.0
      %1387 = vmatmul.mubr.f32.gmra.mxu0 %v1251
      %v1388 = vpop.f32.mrf.mxu0
      %v1389 = vadd.f32 %v1280, %v1388
      %v1390 = vpop.f32.mrf.mxu0
      %1391 = vmatprep.mubr.f32.mxu0 0.0
      %1392 = vmatmul.mubr.f32.gmra.mxu0 %v1252
      %v1393 = vpop.f32.mrf.mxu0
      %v1394 = vadd.f32 %v1280, %v1393
      %v1395 = vpop.f32.mrf.mxu0
      %1396 = vmatprep.mubr.f32.mxu0 0.0
      %1397 = vmatmul.mubr.f32.gmra.mxu0 %v1253
      %v1398 = vpop.f32.mrf.mxu0
      %v1399 = vadd.f32 %v1280, %v1398
      %v1400 = vpop.f32.mrf.mxu0
      %1401 = vmatprep.mubr.f32.mxu0 0.0
      %1402 = vmatmul.mubr.f32.gmra.mxu0 %v1254
      %v1403 = vpop.f32.mrf.mxu0
      %v1404 = vadd.f32 %v1280, %v1403
      %v1405 = vpop.f32.mrf.mxu0
      %1406 = vmatprep.mubr.f32.mxu0 0.0
      %1407 = vmatmul.mubr.f32.gmra.mxu0 %v1255
      %v1408 = vpop.f32.mrf.mxu0
      %v1409 = vadd.f32 %v1280, %v1408
      %v1410 = vpop.f32.mrf.mxu0
      %1411 = vmatprep.mubr.f32.mxu0 0.0
      %1412 = vmatmul.mubr.f32.gmra.mxu0 %v1256
      %v1413 = vpop.f32.mrf.mxu0
      %v1414 = vadd.f32 %v1280, %v1413
      %v1415 = vpop.f32.mrf.mxu0
      %1416 = vmatprep.mubr.f32.mxu0 0.0
      %1417 = vmatmul.mubr.f32.gmra.mxu0 %v1257
      %v1418 = vpop.f32.mrf.mxu0
      %v1419 = vadd.f32 %v1280, %v1418
      %v1420 = vpop.f32.mrf.mxu0
      %1421 = vmatprep.mubr.f32.mxu0 0.0
      %1422 = vmatmul.mubr.f32.gmra.mxu0 %v1258
      %v1423 = vpop.f32.mrf.mxu0
      %v1424 = vadd.f32 %v1280, %v1423
      %v1425 = vpop.f32.mrf.mxu0
      %1426 = vdwg.mxu0
      %v1427 = vmax.f32 %v1349, 0.0
      %v1428 = vmax.f32 %v1354, 0.0
      %v1429 = vmax.f32 %v1359, 0.0
      %v1430 = vmax.f32 %v1364, 0.0
      %v1431 = vmax.f32 %v1369, 0.0
      %v1432 = vmax.f32 %v1374, 0.0
      %v1433 = vmax.f32 %v1379, 0.0
      %v1434 = vmax.f32 %v1384, 0.0
      %v1435 = vmax.f32 %v1389, 0.0
      %v1436 = vmax.f32 %v1394, 0.0
      %v1437 = vmax.f32 %v1399, 0.0
      %v1438 = vmax.f32 %v1404, 0.0
      %v1439 = vmax.f32 %v1409, 0.0
      %v1440 = vmax.f32 %v1414, 0.0
      %v1441 = vmax.f32 %v1419, 0.0
      %v1442 = vmax.f32 %v1424, 0.0
      %v1443 = vld [vmem:[%s10] sm:$0xff]
      %v1444 = vld [vmem:[%s10 + $0x8] sm:$0xff]
      %v1445 = vld [vmem:[%s10 + $0x10] sm:$0xff]
      %v1446 = vld [vmem:[%s10 + $0x18] sm:$0xff]
      %v1447 = vld [vmem:[%s10 + $0x20] sm:$0xff]
      %v1448 = vld [vmem:[%s10 + $0x28] sm:$0xff]
      %v1449 = vld [vmem:[%s10 + $0x30] sm:$0xff]
      %v1450 = vld [vmem:[%s10 + $0x38] sm:$0xff]
      %v1451 = vld [vmem:[%s10 + $0x40] sm:$0xff]
      %v1452 = vld [vmem:[%s10 + $0x48] sm:$0xff]
      %v1453 = vld [vmem:[%s10 + $0x50] sm:$0xff]
      %v1454 = vld [vmem:[%s10 + $0x58] sm:$0xff]
      %v1455 = vld [vmem:[%s10 + $0x60] sm:$0xff]
      %v1456 = vld [vmem:[%s10 + $0x68] sm:$0xff]
      %v1457 = vld [vmem:[%s10 + $0x70] sm:$0xff]
      %v1458 = vld [vmem:[%s10 + $0x78] sm:$0xff]
      %v1459 = vld [vmem:[%s11] sm:$0x1]
      %v1461 = vlaneseq
      %v1462 = vshrl.u32 %v1461, 7
      %v1463 = vsub.s32 0, %v1462
      %v1464 = vrot.slane %v1459, %v1463
      %1466 = vmatprep.subr.mxu0 0.0
      %1467 = vmatpush1.msra.mxu0 %v1458
      %1468 = vmatprep.subr.mxu0 0.0
      %1469 = vmatpush1.msra.mxu0 %v1457
      %1470 = vmatprep.subr.mxu0 0.0
      %1471 = vmatpush1.msra.mxu0 %v1456
      %1472 = vmatprep.subr.mxu0 0.0
      %1473 = vmatpush1.msra.mxu0 %v1455
      %1474 = vmatprep.subr.mxu0 0.0
      %1475 = vmatpush1.msra.mxu0 %v1454
      %1476 = vmatprep.subr.mxu0 0.0
      %1477 = vmatpush1.msra.mxu0 %v1453
      %1478 = vmatprep.subr.mxu0 0.0
      %1479 = vmatpush1.msra.mxu0 %v1452
      %1480 = vmatprep.subr.mxu0 0.0
      %1481 = vmatpush1.msra.mxu0 %v1451
      %1482 = vmatprep.subr.mxu0 0.0
      %1483 = vmatpush1.msra.mxu0 %v1450
      %1484 = vmatprep.subr.mxu0 0.0
      %1485 = vmatpush1.msra.mxu0 %v1449
      %1486 = vmatprep.subr.mxu0 0.0
      %1487 = vmatpush1.msra.mxu0 %v1448
      %1488 = vmatprep.subr.mxu0 0.0
      %1489 = vmatpush1.msra.mxu0 %v1447
      %1490 = vmatprep.subr.mxu0 0.0
      %1491 = vmatpush1.msra.mxu0 %v1446
      %1492 = vmatprep.subr.mxu0 0.0
      %1493 = vmatpush1.msra.mxu0 %v1445
      %1494 = vmatprep.subr.mxu0 0.0
      %1495 = vmatpush1.msra.mxu0 %v1444
      %1496 = vmatprep.subr.mxu0 0.0
      %1497 = vmatpush1.msra.mxu0 %v1443
      %1498 = vmatprep.subr.mxu0 0.0
      %1499 = vmatpush2.msra.mxu0 0.0
      %1500 = vmatprep.subr.mxu0 0.0
      %1501 = vmatpush2.msra.mxu0 0.0
      %1502 = vmatprep.subr.mxu0 0.0
      %1503 = vmatpush2.msra.mxu0 0.0
      %1504 = vmatprep.subr.mxu0 0.0
      %1505 = vmatpush2.msra.mxu0 0.0
      %1506 = vmatprep.subr.mxu0 0.0
      %1507 = vmatpush2.msra.mxu0 0.0
      %1508 = vmatprep.subr.mxu0 0.0
      %1509 = vmatpush2.msra.mxu0 0.0
      %1510 = vmatprep.subr.mxu0 0.0
      %1511 = vmatpush2.msra.mxu0 0.0
      %1512 = vmatprep.subr.mxu0 0.0
      %1513 = vmatpush2.msra.mxu0 0.0
      %1514 = vmatprep.subr.mxu0 0.0
      %1515 = vmatpush2.msra.mxu0 0.0
      %1516 = vmatprep.subr.mxu0 0.0
      %1517 = vmatpush2.msra.mxu0 0.0
      %1518 = vmatprep.subr.mxu0 0.0
      %1519 = vmatpush2.msra.mxu0 0.0
      %1520 = vmatprep.subr.mxu0 0.0
      %1521 = vmatpush2.msra.mxu0 0.0
      %1522 = vmatprep.subr.mxu0 0.0
      %1523 = vmatpush2.msra.mxu0 0.0
      %1524 = vmatprep.subr.mxu0 0.0
      %1525 = vmatpush2.msra.mxu0 0.0
      %1526 = vmatprep.subr.mxu0 0.0
      %1527 = vmatpush2.msra.mxu0 0.0
      %1528 = vmatprep.subr.mxu0 0.0
      %1529 = vmatpush2.msra.mxu0 0.0
      %1530 = vmatprep.mubr.f32.mxu0 0.0
      %1531 = vmatmul.mubr.f32.gmra.mxu0 %v1427
      %v1532 = vpop.f32.mrf.mxu0
      %v1533 = vadd.f32 %v1464, %v1532
      %v1534 = vpop.f32.mrf.mxu0
      %1535 = vmatprep.mubr.f32.mxu0 0.0
      %1536 = vmatmul.mubr.f32.gmra.mxu0 %v1428
      %v1537 = vpop.f32.mrf.mxu0
      %v1538 = vadd.f32 %v1464, %v1537
      %v1539 = vpop.f32.mrf.mxu0
      %1540 = vmatprep.mubr.f32.mxu0 0.0
      %1541 = vmatmul.mubr.f32.gmra.mxu0 %v1429
      %v1542 = vpop.f32.mrf.mxu0
      %v1543 = vadd.f32 %v1464, %v1542
      %v1544 = vpop.f32.mrf.mxu0
      %1545 = vmatprep.mubr.f32.mxu0 0.0
      %1546 = vmatmul.mubr.f32.gmra.mxu0 %v1430
      %v1547 = vpop.f32.mrf.mxu0
      %v1548 = vadd.f32 %v1464, %v1547
      %v1549 = vpop.f32.mrf.mxu0
      %1550 = vmatprep.mubr.f32.mxu0 0.0
      %1551 = vmatmul.mubr.f32.gmra.mxu0 %v1431
      %v1552 = vpop.f32.mrf.mxu0
      %v1553 = vadd.f32 %v1464, %v1552
      %v1554 = vpop.f32.mrf.mxu0
      %1555 = vmatprep.mubr.f32.mxu0 0.0
      %1556 = vmatmul.mubr.f32.gmra.mxu0 %v1432
      %v1557 = vpop.f32.mrf.mxu0
      %v1558 = vadd.f32 %v1464, %v1557
      %v1559 = vpop.f32.mrf.mxu0
      %1560 = vmatprep.mubr.f32.mxu0 0.0
      %1561 = vmatmul.mubr.f32.gmra.mxu0 %v1433
      %v1562 = vpop.f32.mrf.mxu0
      %v1563 = vadd.f32 %v1464, %v1562
      %v1564 = vpop.f32.mrf.mxu0
      %1565 = vmatprep.mubr.f32.mxu0 0.0
      %1566 = vmatmul.mubr.f32.gmra.mxu0 %v1434
      %v1567 = vpop.f32.mrf.mxu0
      %v1568 = vadd.f32 %v1464, %v1567
      %v1569 = vpop.f32.mrf.mxu0
      %1570 = vmatprep.mubr.f32.mxu0 0.0
      %1571 = vmatmul.mubr.f32.gmra.mxu0 %v1435
      %v1572 = vpop.f32.mrf.mxu0
      %v1573 = vadd.f32 %v1464, %v1572
      %v1574 = vpop.f32.mrf.mxu0
      %1575 = vmatprep.mubr.f32.mxu0 0.0
      %1576 = vmatmul.mubr.f32.gmra.mxu0 %v1436
      %v1577 = vpop.f32.mrf.mxu0
      %v1578 = vadd.f32 %v1464, %v1577
      %v1579 = vpop.f32.mrf.mxu0
      %1580 = vmatprep.mubr.f32.mxu0 0.0
      %1581 = vmatmul.mubr.f32.gmra.mxu0 %v1437
      %v1582 = vpop.f32.mrf.mxu0
      %v1583 = vadd.f32 %v1464, %v1582
      %v1584 = vpop.f32.mrf.mxu0
      %1585 = vmatprep.mubr.f32.mxu0 0.0
      %1586 = vmatmul.mubr.f32.gmra.mxu0 %v1438
      %v1587 = vpop.f32.mrf.mxu0
      %v1588 = vadd.f32 %v1464, %v1587
      %v1589 = vpop.f32.mrf.mxu0
      %1590 = vmatprep.mubr.f32.mxu0 0.0
      %1591 = vmatmul.mubr.f32.gmra.mxu0 %v1439
      %v1592 = vpop.f32.mrf.mxu0
      %v1593 = vadd.f32 %v1464, %v1592
      %v1594 = vpop.f32.mrf.mxu0
      %1595 = vmatprep.mubr.f32.mxu0 0.0
      %1596 = vmatmul.mubr.f32.gmra.mxu0 %v1440
      %v1597 = vpop.f32.mrf.mxu0
      %v1598 = vadd.f32 %v1464, %v1597
      %v1599 = vpop.f32.mrf.mxu0
      %1600 = vmatprep.mubr.f32.mxu0 0.0
      %1601 = vmatmul.mubr.f32.gmra.mxu0 %v1441
      %v1602 = vpop.f32.mrf.mxu0
      %v1603 = vadd.f32 %v1464, %v1602
      %v1604 = vpop.f32.mrf.mxu0
      %1605 = vmatprep.mubr.f32.mxu0 0.0
      %1606 = vmatmul.mubr.f32.gmra.mxu0 %v1442
      %v1607 = vpop.f32.mrf.mxu0
      %v1608 = vadd.f32 %v1464, %v1607
      %v1609 = vpop.f32.mrf.mxu0
      %1610 = vdwg.mxu0
      %v1611 = vmax.f32 %v1533, 0.0
      %v1612 = vmax.f32 %v1538, 0.0
      %v1613 = vmax.f32 %v1543, 0.0
      %v1614 = vmax.f32 %v1548, 0.0
      %v1615 = vmax.f32 %v1553, 0.0
      %v1616 = vmax.f32 %v1558, 0.0
      %v1617 = vmax.f32 %v1563, 0.0
      %v1618 = vmax.f32 %v1568, 0.0
      %v1619 = vmax.f32 %v1573, 0.0
      %v1620 = vmax.f32 %v1578, 0.0
      %v1621 = vmax.f32 %v1583, 0.0
      %v1622 = vmax.f32 %v1588, 0.0
      %v1623 = vmax.f32 %v1593, 0.0
      %v1624 = vmax.f32 %v1598, 0.0
      %v1625 = vmax.f32 %v1603, 0.0
      %v1626 = vmax.f32 %v1608, 0.0
      %v1627 = vld [vmem:[%s12] sm:$0xff]
      %v1628 = vld [vmem:[%s12 + $0x8] sm:$0xff]
      %v1629 = vld [vmem:[%s12 + $0x10] sm:$0xff]
      %v1630 = vld [vmem:[%s12 + $0x18] sm:$0xff]
      %v1631 = vld [vmem:[%s12 + $0x20] sm:$0xff]
      %v1632 = vld [vmem:[%s12 + $0x28] sm:$0xff]
      %v1633 = vld [vmem:[%s12 + $0x30] sm:$0xff]
      %v1634 = vld [vmem:[%s12 + $0x38] sm:$0xff]
      %v1635 = vld [vmem:[%s12 + $0x40] sm:$0xff]
      %v1636 = vld [vmem:[%s12 + $0x48] sm:$0xff]
      %v1637 = vld [vmem:[%s12 + $0x50] sm:$0xff]
      %v1638 = vld [vmem:[%s12 + $0x58] sm:$0xff]
      %v1639 = vld [vmem:[%s12 + $0x60] sm:$0xff]
      %v1640 = vld [vmem:[%s12 + $0x68] sm:$0xff]
      %v1641 = vld [vmem:[%s12 + $0x70] sm:$0xff]
      %v1642 = vld [vmem:[%s12 + $0x78] sm:$0xff]
      %v1643 = vld [vmem:[%s13] sm:$0x1]
      %v1645 = vlaneseq
      %v1646 = vshrl.u32 %v1645, 7
      %v1647 = vsub.s32 0, %v1646
      %v1648 = vrot.slane %v1643, %v1647
      %1650 = vmatprep.subr.mxu0 0.0
      %1651 = vmatpush1.msra.mxu0 %v1642
      %1652 = vmatprep.subr.mxu0 0.0
      %1653 = vmatpush1.msra.mxu0 %v1641
      %1654 = vmatprep.subr.mxu0 0.0
      %1655 = vmatpush1.msra.mxu0 %v1640
      %1656 = vmatprep.subr.mxu0 0.0
      %1657 = vmatpush1.msra.mxu0 %v1639
      %1658 = vmatprep.subr.mxu0 0.0
      %1659 = vmatpush1.msra.mxu0 %v1638
      %1660 = vmatprep.subr.mxu0 0.0
      %1661 = vmatpush1.msra.mxu0 %v1637
      %1662 = vmatprep.subr.mxu0 0.0
      %1663 = vmatpush1.msra.mxu0 %v1636
      %1664 = vmatprep.subr.mxu0 0.0
      %1665 = vmatpush1.msra.mxu0 %v1635
      %1666 = vmatprep.subr.mxu0 0.0
      %1667 = vmatpush1.msra.mxu0 %v1634
      %1668 = vmatprep.subr.mxu0 0.0
      %1669 = vmatpush1.msra.mxu0 %v1633
      %1670 = vmatprep.subr.mxu0 0.0
      %1671 = vmatpush1.msra.mxu0 %v1632
      %1672 = vmatprep.subr.mxu0 0.0
      %1673 = vmatpush1.msra.mxu0 %v1631
      %1674 = vmatprep.subr.mxu0 0.0
      %1675 = vmatpush1.msra.mxu0 %v1630
      %1676 = vmatprep.subr.mxu0 0.0
      %1677 = vmatpush1.msra.mxu0 %v1629
      %1678 = vmatprep.subr.mxu0 0.0
      %1679 = vmatpush1.msra.mxu0 %v1628
      %1680 = vmatprep.subr.mxu0 0.0
      %1681 = vmatpush1.msra.mxu0 %v1627
      %1682 = vmatprep.subr.mxu0 0.0
      %1683 = vmatpush2.msra.mxu0 0.0
      %1684 = vmatprep.subr.mxu0 0.0
      %1685 = vmatpush2.msra.mxu0 0.0
      %1686 = vmatprep.subr.mxu0 0.0
      %1687 = vmatpush2.msra.mxu0 0.0
      %1688 = vmatprep.subr.mxu0 0.0
      %1689 = vmatpush2.msra.mxu0 0.0
      %1690 = vmatprep.subr.mxu0 0.0
      %1691 = vmatpush2.msra.mxu0 0.0
      %1692 = vmatprep.subr.mxu0 0.0
      %1693 = vmatpush2.msra.mxu0 0.0
      %1694 = vmatprep.subr.mxu0 0.0
      %1695 = vmatpush2.msra.mxu0 0.0
      %1696 = vmatprep.subr.mxu0 0.0
      %1697 = vmatpush2.msra.mxu0 0.0
      %1698 = vmatprep.subr.mxu0 0.0
      %1699 = vmatpush2.msra.mxu0 0.0
      %1700 = vmatprep.subr.mxu0 0.0
      %1701 = vmatpush2.msra.mxu0 0.0
      %1702 = vmatprep.subr.mxu0 0.0
      %1703 = vmatpush2.msra.mxu0 0.0
      %1704 = vmatprep.subr.mxu0 0.0
      %1705 = vmatpush2.msra.mxu0 0.0
      %1706 = vmatprep.subr.mxu0 0.0
      %1707 = vmatpush2.msra.mxu0 0.0
      %1708 = vmatprep.subr.mxu0 0.0
      %1709 = vmatpush2.msra.mxu0 0.0
      %1710 = vmatprep.subr.mxu0 0.0
      %1711 = vmatpush2.msra.mxu0 0.0
      %1712 = vmatprep.subr.mxu0 0.0
      %1713 = vmatpush2.msra.mxu0 0.0
      %1714 = vmatprep.mubr.f32.mxu0 0.0
      %1715 = vmatmul.mubr.f32.gmra.mxu0 %v1611
      %v1716 = vpop.f32.mrf.mxu0
      %v1717 = vadd.f32 %v1648, %v1716
      %v1718 = vpop.f32.mrf.mxu0
      %1719 = vmatprep.mubr.f32.mxu0 0.0
      %1720 = vmatmul.mubr.f32.gmra.mxu0 %v1612
      %v1721 = vpop.f32.mrf.mxu0
      %v1722 = vadd.f32 %v1648, %v1721
      %v1723 = vpop.f32.mrf.mxu0
      %1724 = vmatprep.mubr.f32.mxu0 0.0
      %1725 = vmatmul.mubr.f32.gmra.mxu0 %v1613
      %v1726 = vpop.f32.mrf.mxu0
      %v1727 = vadd.f32 %v1648, %v1726
      %v1728 = vpop.f32.mrf.mxu0
      %1729 = vmatprep.mubr.f32.mxu0 0.0
      %1730 = vmatmul.mubr.f32.gmra.mxu0 %v1614
      %v1731 = vpop.f32.mrf.mxu0
      %v1732 = vadd.f32 %v1648, %v1731
      %v1733 = vpop.f32.mrf.mxu0
      %1734 = vmatprep.mubr.f32.mxu0 0.0
      %1735 = vmatmul.mubr.f32.gmra.mxu0 %v1615
      %v1736 = vpop.f32.mrf.mxu0
      %v1737 = vadd.f32 %v1648, %v1736
      %v1738 = vpop.f32.mrf.mxu0
      %1739 = vmatprep.mubr.f32.mxu0 0.0
      %1740 = vmatmul.mubr.f32.gmra.mxu0 %v1616
      %v1741 = vpop.f32.mrf.mxu0
      %v1742 = vadd.f32 %v1648, %v1741
      %v1743 = vpop.f32.mrf.mxu0
      %1744 = vmatprep.mubr.f32.mxu0 0.0
      %1745 = vmatmul.mubr.f32.gmra.mxu0 %v1617
      %v1746 = vpop.f32.mrf.mxu0
      %v1747 = vadd.f32 %v1648, %v1746
      %v1748 = vpop.f32.mrf.mxu0
      %1749 = vmatprep.mubr.f32.mxu0 0.0
      %1750 = vmatmul.mubr.f32.gmra.mxu0 %v1618
      %v1751 = vpop.f32.mrf.mxu0
      %v1752 = vadd.f32 %v1648, %v1751
      %v1753 = vpop.f32.mrf.mxu0
      %1754 = vmatprep.mubr.f32.mxu0 0.0
      %1755 = vmatmul.mubr.f32.gmra.mxu0 %v1619
      %v1756 = vpop.f32.mrf.mxu0
      %v1757 = vadd.f32 %v1648, %v1756
      %v1758 = vpop.f32.mrf.mxu0
      %1759 = vmatprep.mubr.f32.mxu0 0.0
      %1760 = vmatmul.mubr.f32.gmra.mxu0 %v1620
      %v1761 = vpop.f32.mrf.mxu0
      %v1762 = vadd.f32 %v1648, %v1761
      %v1763 = vpop.f32.mrf.mxu0
      %1764 = vmatprep.mubr.f32.mxu0 0.0
      %1765 = vmatmul.mubr.f32.gmra.mxu0 %v1621
      %v1766 = vpop.f32.mrf.mxu0
      %v1767 = vadd.f32 %v1648, %v1766
      %v1768 = vpop.f32.mrf.mxu0
      %1769 = vmatprep.mubr.f32.mxu0 0.0
      %1770 = vmatmul.mubr.f32.gmra.mxu0 %v1622
      %v1771 = vpop.f32.mrf.mxu0
      %v1772 = vadd.f32 %v1648, %v1771
      %v1773 = vpop.f32.mrf.mxu0
      %1774 = vmatprep.mubr.f32.mxu0 0.0
      %1775 = vmatmul.mubr.f32.gmra.mxu0 %v1623
      %v1776 = vpop.f32.mrf.mxu0
      %v1777 = vadd.f32 %v1648, %v1776
      %v1778 = vpop.f32.mrf.mxu0
      %1779 = vmatprep.mubr.f32.mxu0 0.0
      %1780 = vmatmul.mubr.f32.gmra.mxu0 %v1624
      %v1781 = vpop.f32.mrf.mxu0
      %v1782 = vadd.f32 %v1648, %v1781
      %v1783 = vpop.f32.mrf.mxu0
      %1784 = vmatprep.mubr.f32.mxu0 0.0
      %1785 = vmatmul.mubr.f32.gmra.mxu0 %v1625
      %v1786 = vpop.f32.mrf.mxu0
      %v1787 = vadd.f32 %v1648, %v1786
      %v1788 = vpop.f32.mrf.mxu0
      %1789 = vmatprep.mubr.f32.mxu0 0.0
      %1790 = vmatmul.mubr.f32.gmra.mxu0 %v1626
      %v1791 = vpop.f32.mrf.mxu0
      %v1792 = vadd.f32 %v1648, %v1791
      %v1793 = vpop.f32.mrf.mxu0
      %1794 = vdwg.mxu0
      %v1795 = vxor.u32 %v1717, 2147483648
      %v1796 = vxor.u32 %v1722, 2147483648
      %v1797 = vxor.u32 %v1727, 2147483648
      %v1798 = vxor.u32 %v1732, 2147483648
      %v1799 = vxor.u32 %v1737, 2147483648
      %v1800 = vxor.u32 %v1742, 2147483648
      %v1801 = vxor.u32 %v1747, 2147483648
      %v1802 = vxor.u32 %v1752, 2147483648
      %v1803 = vxor.u32 %v1757, 2147483648
      %v1804 = vxor.u32 %v1762, 2147483648
      %v1805 = vxor.u32 %v1767, 2147483648
      %v1806 = vxor.u32 %v1772, 2147483648
      %v1807 = vxor.u32 %v1777, 2147483648
      %v1808 = vxor.u32 %v1782, 2147483648
      %v1809 = vxor.u32 %v1787, 2147483648
      %v1810 = vxor.u32 %v1792, 2147483648
      %v1811 = vmul.f32 %v1795, 1.442695
      %v1812 = vpow.pop %v1811
      %v1813 = vmul.f32 %v1796, 1.442695
      %v1814 = vpow.pop %v1813
      %v1815 = vmul.f32 %v1797, 1.442695
      %v1816 = vpow.pop %v1815
      %v1817 = vmul.f32 %v1798, 1.442695
      %v1818 = vpow.pop %v1817
      %v1819 = vmul.f32 %v1799, 1.442695
      %v1820 = vpow.pop %v1819
      %v1821 = vmul.f32 %v1800, 1.442695
      %v1822 = vpow.pop %v1821
      %v1823 = vmul.f32 %v1801, 1.442695
      %v1824 = vpow.pop %v1823
      %v1825 = vmul.f32 %v1802, 1.442695
      %v1826 = vpow.pop %v1825
      %v1827 = vmul.f32 %v1803, 1.442695
      %v1828 = vpow.pop %v1827
      %v1829 = vmul.f32 %v1804, 1.442695
      %v1830 = vpow.pop %v1829
      %v1831 = vmul.f32 %v1805, 1.442695
      %v1832 = vpow.pop %v1831
      %v1833 = vmul.f32 %v1806, 1.442695
      %v1834 = vpow.pop %v1833
      %v1835 = vmul.f32 %v1807, 1.442695
      %v1836 = vpow.pop %v1835
      %v1837 = vmul.f32 %v1808, 1.442695
      %v1838 = vpow.pop %v1837
      %v1839 = vmul.f32 %v1809, 1.442695
      %v1840 = vpow.pop %v1839
      %v1841 = vmul.f32 %v1810, 1.442695
      %v1842 = vpow.pop %v1841
      %v1843 = vadd.f32 %v1812, 1.0
      %v1844 = vadd.f32 %v1814, 1.0
      %v1845 = vadd.f32 %v1816, 1.0
      %v1846 = vadd.f32 %v1818, 1.0
      %v1847 = vadd.f32 %v1820, 1.0
      %v1848 = vadd.f32 %v1822, 1.0
      %v1849 = vadd.f32 %v1824, 1.0
      %v1850 = vadd.f32 %v1826, 1.0
      %v1851 = vadd.f32 %v1828, 1.0
      %v1852 = vadd.f32 %v1830, 1.0
      %v1853 = vadd.f32 %v1832, 1.0
      %v1854 = vadd.f32 %v1834, 1.0
      %v1855 = vadd.f32 %v1836, 1.0
      %v1856 = vadd.f32 %v1838, 1.0
      %v1857 = vadd.f32 %v1840, 1.0
      %v1858 = vadd.f32 %v1842, 1.0
      %v1859 = vrcp.pop %v1843
      %v1860 = vmul.f32 1.0, %v1859
      %v1861 = vrcp.pop %v1844
      %v1862 = vmul.f32 1.0, %v1861
      %v1863 = vrcp.pop %v1845
      %v1864 = vmul.f32 1.0, %v1863
      %v1865 = vrcp.pop %v1846
      %v1866 = vmul.f32 1.0, %v1865
      %v1867 = vrcp.pop %v1847
      %v1868 = vmul.f32 1.0, %v1867
      %v1869 = vrcp.pop %v1848
      %v1870 = vmul.f32 1.0, %v1869
      %v1871 = vrcp.pop %v1849
      %v1872 = vmul.f32 1.0, %v1871
      %v1873 = vrcp.pop %v1850
      %v1874 = vmul.f32 1.0, %v1873
      %v1875 = vrcp.pop %v1851
      %v1876 = vmul.f32 1.0, %v1875
      %v1877 = vrcp.pop %v1852
      %v1878 = vmul.f32 1.0, %v1877
      %v1879 = vrcp.pop %v1853
      %v1880 = vmul.f32 1.0, %v1879
      %v1881 = vrcp.pop %v1854
      %v1882 = vmul.f32 1.0, %v1881
      %v1883 = vrcp.pop %v1855
      %v1884 = vmul.f32 1.0, %v1883
      %v1885 = vrcp.pop %v1856
      %v1886 = vmul.f32 1.0, %v1885
      %v1887 = vrcp.pop %v1857
      %v1888 = vmul.f32 1.0, %v1887
      %v1889 = vrcp.pop %v1858
      %v1890 = vmul.f32 1.0, %v1889
      %1891 = vst [vmem:[%s560] sm:$0xff] %v1860
      %1892 = vst [vmem:[%s560 + $0x8] sm:$0xff] %v1862
      %1893 = vst [vmem:[%s560 + $0x10] sm:$0xff] %v1864
      %1894 = vst [vmem:[%s560 + $0x18] sm:$0xff] %v1866
      %1895 = vst [vmem:[%s560 + $0x20] sm:$0xff] %v1868
      %1896 = vst [vmem:[%s560 + $0x28] sm:$0xff] %v1870
      %1897 = vst [vmem:[%s560 + $0x30] sm:$0xff] %v1872
      %1898 = vst [vmem:[%s560 + $0x38] sm:$0xff] %v1874
      %1899 = vst [vmem:[%s560 + $0x40] sm:$0xff] %v1876
      %1900 = vst [vmem:[%s560 + $0x48] sm:$0xff] %v1878
      %1901 = vst [vmem:[%s560 + $0x50] sm:$0xff] %v1880
      %1902 = vst [vmem:[%s560 + $0x58] sm:$0xff] %v1882
      %1903 = vst [vmem:[%s560 + $0x60] sm:$0xff] %v1884
      %1904 = vst [vmem:[%s560 + $0x68] sm:$0xff] %v1886
      %1905 = vst [vmem:[%s560 + $0x70] sm:$0xff] %v1888
      %1906 = vst [vmem:[%s560 + $0x78] sm:$0xff] %v1890
      %1907 = vst [vmem:[%s566] sm:$0xff] %v1069
      %1908 = vst [vmem:[%s566 + $0x8] sm:$0xff] %v1075
      %1909 = vst [vmem:[%s566 + $0x10] sm:$0xff] %v1081
      %1910 = vst [vmem:[%s566 + $0x18] sm:$0xff] %v1087
      %1911 = vst [vmem:[%s566 + $0x20] sm:$0xff] %v1093
      %1912 = vst [vmem:[%s566 + $0x28] sm:$0xff] %v1099
      %1913 = vst [vmem:[%s566 + $0x30] sm:$0xff] %v1105
      %1914 = vst [vmem:[%s566 + $0x38] sm:$0xff] %v1111
      %1915 = vst [vmem:[%s566 + $0x40] sm:$0xff] %v1117
      %1916 = vst [vmem:[%s566 + $0x48] sm:$0xff] %v1123
      %1917 = vst [vmem:[%s566 + $0x50] sm:$0xff] %v1129
      %1918 = vst [vmem:[%s566 + $0x58] sm:$0xff] %v1135
      %1919 = vst [vmem:[%s566 + $0x60] sm:$0xff] %v1141
      %1920 = vst [vmem:[%s566 + $0x68] sm:$0xff] %v1147
      %1921 = vst [vmem:[%s566 + $0x70] sm:$0xff] %v1153
      %1922 = vst [vmem:[%s566 + $0x78] sm:$0xff] %v1159
      %1923 = vst [vmem:[%s572] sm:$0xff] %v1071
      %1924 = vst [vmem:[%s572 + $0x8] sm:$0xff] %v1077
      %1925 = vst [vmem:[%s572 + $0x10] sm:$0xff] %v1083
      %1926 = vst [vmem:[%s572 + $0x18] sm:$0xff] %v1089
      %1927 = vst [vmem:[%s572 + $0x20] sm:$0xff] %v1095
      %1928 = vst [vmem:[%s572 + $0x28] sm:$0xff] %v1101
      %1929 = vst [vmem:[%s572 + $0x30] sm:$0xff] %v1107
      %1930 = vst [vmem:[%s572 + $0x38] sm:$0xff] %v1113
      %1931 = vst [vmem:[%s572 + $0x40] sm:$0xff] %v1119
      %1932 = vst [vmem:[%s572 + $0x48] sm:$0xff] %v1125
      %1933 = vst [vmem:[%s572 + $0x50] sm:$0xff] %v1131
      %1934 = vst [vmem:[%s572 + $0x58] sm:$0xff] %v1137
      %1935 = vst [vmem:[%s572 + $0x60] sm:$0xff] %v1143
      %1936 = vst [vmem:[%s572 + $0x68] sm:$0xff] %v1149
      %1937 = vst [vmem:[%s572 + $0x70] sm:$0xff] %v1155
      %1938 = vst [vmem:[%s572 + $0x78] sm:$0xff] %v1161
      %s1939 = smul.u32 16, %s28
      %p1940 = scmp.lt.s32.totalorder %s1939, 31
      %s1941 = scalar_select %p1940, %s1939, 31
      %s1942 = smul.addr %s1941, 8
      %s1943 = scalar_lea.vmem %s14, %s1942
      %s1944 = smul.u32 16, %s28
      %p1945 = scmp.lt.s32.totalorder %s1944, 31
      %s1946 = scalar_select %p1945, %s1944, 31
      %s1947 = smul.addr %s1946, 8
      %s1948 = scalar_lea.vmem %s15, %s1947
      %s1949 = smul.u32 16, %s28
      %p1950 = scmp.lt.s32.totalorder %s1949, 31
      %s1951 = scalar_select %p1950, %s1949, 31
      %s1952 = smul.addr %s1951, 8
      %s1953 = scalar_lea.vmem %s16, %s1952
      // Predicated region
      $region77: #{vae_forward_pallas.1} parent=75 // pred_check
        %p1954 = pneg %p350
      $region78: #{vae_forward_pallas.1} parent=75 // pred_check_branch
        %1956 = sbr.rel (%p1954) target = $region80
      $region79: #{vae_forward_pallas.1} parent=75 // pred_region
        %s1957 = smul.u32 16, %s28
      $region80: #{vae_forward_pallas.1} parent=75 // pred_fallthru
        _
      // Predicated region
      $region81: #{vae_forward_pallas.1} parent=75 // pred_check
        %p1958 = pneg %p376
      $region82: #{vae_forward_pallas.1} parent=75 // pred_check_branch
        %1960 = sbr.rel (%p1958) target = $region84
      $region83: #{vae_forward_pallas.1} parent=75 // pred_region
        %s1961 = smul.u32 16, %s28
      $region84: #{vae_forward_pallas.1} parent=75 // pred_fallthru
        _
      // Predicated region
      $region85: #{vae_forward_pallas.1} parent=75 // pred_check
        %p1962 = pneg %p402
      $region86: #{vae_forward_pallas.1} parent=75 // pred_check_branch
        %1964 = sbr.rel (%p1962) target = $region88
      $region87: #{vae_forward_pallas.1} parent=75 // pred_region
        %s1965 = smul.u32 16, %s28
      $region88: #{vae_forward_pallas.1} parent=75 // pred_fallthru
        _
    $region76: #{vae_forward_pallas.1} parent=5 // pred_fallthru
      _
    %p1966 = scmp.le.s32.totalorder 2, %s23
    // Predicated region
    $region89: #{vae_forward_pallas.1} parent=5 // pred_check
      %p1967 = pneg %p1966
    $region90: #{vae_forward_pallas.1} parent=5 // pred_check_branch
      %1969 = sbr.rel (%p1967) target = $region92
    $region91: #{vae_forward_pallas.1} parent=5 // pred_region
      %s1970 = ssub.s32 %s23, 2
      // Predicated region
      $region93: #{vae_forward_pallas.1} parent=91 // pred_check
        %p1971 = pneg %p356
      $region94: #{vae_forward_pallas.1} parent=91 // pred_check_branch
        %1973 = sbr.rel (%p1971) target = $region96
      $region95: #{vae_forward_pallas.1} parent=91 // pred_region
        %s1974 = smul.u32 16, %s29
        %p1975 = scmp.lt.s32.totalorder %s1974, 31
        %s1976 = scalar_select %p1975, %s1974, 31
        %s1977 = smul.addr %s1976, 8
        %s1978 = scalar_lea.vmem %s14, %s1977
      $region96: #{vae_forward_pallas.1} parent=91 // pred_fallthru
        _
      // Predicated region
      $region97: #{vae_forward_pallas.1} parent=91 // pred_check
        %p1979 = pneg %p382
      $region98: #{vae_forward_pallas.1} parent=91 // pred_check_branch
        %1981 = sbr.rel (%p1979) target = $region100
      $region99: #{vae_forward_pallas.1} parent=91 // pred_region
        %s1982 = smul.u32 16, %s29
        %p1983 = scmp.lt.s32.totalorder %s1982, 31
        %s1984 = scalar_select %p1983, %s1982, 31
        %s1985 = smul.addr %s1984, 8
        %s1986 = scalar_lea.vmem %s15, %s1985
      $region100: #{vae_forward_pallas.1} parent=91 // pred_fallthru
        _
      // Predicated region
      $region101: #{vae_forward_pallas.1} parent=91 // pred_check
        %p1987 = pneg %p408
      $region102: #{vae_forward_pallas.1} parent=91 // pred_check_branch
        %1989 = sbr.rel (%p1987) target = $region104
      $region103: #{vae_forward_pallas.1} parent=91 // pred_region
        %s1990 = smul.u32 16, %s29
        %p1991 = scmp.lt.s32.totalorder %s1990, 31
        %s1992 = scalar_select %p1991, %s1990, 31
        %s1993 = smul.addr %s1992, 8
        %s1994 = scalar_lea.vmem %s16, %s1993
      $region104: #{vae_forward_pallas.1} parent=91 // pred_fallthru
        _
    $region92: #{vae_forward_pallas.1} parent=5 // pred_fallthru
      _
  $region6: #{vae_forward_pallas.1} parent=0 // loop_footer
    %s27 = sadd.s32 1, %s23
  $region7: #{vae_forward_pallas.1} parent=0 // loop_footer_branch
    %22 = sbr.rel target = $region3
  $region8: #{vae_forward_pallas.1} parent=0 // loop_exit
    _

</llo_original>
